<compile_context>
chip_gen: v6e
topology: v6e:2x2x1
jax: 0.10.0
libtpu: 0.0.40
codegen_flags: <defaults>
</compile_context>

<pallas_src>
import functools

import jax
import jax.numpy as jnp
from jax import lax
from jax.experimental import pallas as pl
from jax.experimental.pallas import tpu as pltpu


# --------------------------------------------------------------------------
# helpers
# --------------------------------------------------------------------------
def _round_up(n, m):
    return ((int(n) + m - 1) // m) * m


def _padded_bytes_2d(shape, itemsize):
    """Physical bytes of a 2-D array in TPU tiled layout (8 x 128 padding)."""
    r, c = int(shape[0]), int(shape[1])
    return _round_up(max(r, 1), 8) * _round_up(max(c, 1), 128) * itemsize


def _pick_tile(batch, block_batch):
    """128-aligned batch tile; guarantees >=2 tiles for megacore when possible."""
    tb = min(batch, block_batch)
    if tb >= 128:
        tb = (tb // 128) * 128
    # If one tile would cover the whole batch but the batch is large enough to
    # split, halve it so dimension_semantics=("parallel",) feeds both v7x TCs.
    if tb >= batch and batch >= 256:
        tb = max(128, ((batch // 2) // 128) * 128)
    num_tiles = pl.cdiv(batch, tb)
    return tb, num_tiles


# --------------------------------------------------------------------------
# kernel
# --------------------------------------------------------------------------
def _make_mlp_kernel(n_rest_fc):
    """Kernel over flat refs:
       user, item, merge,
       W0_user, W0_item, W0_merge, b0,
       (W_k, b_k) * n_rest_fc,
       Wf_row (1, h_last), bf (1, 1),
       out (1, 1, TB)
    """

    def kernel(*refs):
        user_ref, item_ref, merge_ref = refs[0], refs[1], refs[2]
        w0u, w0i, w0m, b0 = (refs[i][...] for i in range(3, 7))
        out_ref = refs[-1]

        # ---- layer 0: torch.cat fused by splitting W0 row-wise ------------
        h = (jnp.dot(user_ref[...], w0u, preferred_element_type=jnp.float32)
             + jnp.dot(item_ref[...], w0i, preferred_element_type=jnp.float32)
             + jnp.dot(merge_ref[...], w0m, preferred_element_type=jnp.float32)
             + b0)
        h = jnp.maximum(h, 0.0)                      # activation_func('relu')

        # ---- remaining fc layers ------------------------------------------
        idx = 7
        for _ in range(n_rest_fc):
            w = refs[idx][...]
            b = refs[idx + 1][...]
            idx += 2
            h = jnp.maximum(
                jnp.dot(h, w, preferred_element_type=jnp.float32) + b, 0.0)

        # ---- final_layer, lane-dense result -------------------------------
        # o[1, TB] = wf_row[1, h_last] @ h[TB, h_last]^T  (+ bf), so the batch
        # dimension lands on the 128-lane axis -> unmasked stores and no N=1
        # matmul.  (Any XLU relayout of h here is free filler while the kernel
        # stays HBM-bound.)
        wf_row = refs[idx][...]                      # (1, h_last)
        bf = refs[idx + 1][...]                      # (1, 1)
        o = lax.dot_general(
            wf_row, h,
            dimension_numbers=(((1,), (1,)), ((), ())),
            preferred_element_type=jnp.float32) + bf  # (1, TB)
        out_ref[...] = jnp.exp(-(o * o)).reshape(out_ref.shape)  # exp(-out^2)

    return kernel


# --------------------------------------------------------------------------
# wrapper
# --------------------------------------------------------------------------
def mlp_forward(user, item, merge_retrieval, params, *,
                block_batch=4096, stream_dtype=jnp.float32):
    """params = ([(W0,b0), (W1,b1), ...], (Wf, bf)); biases shaped (1, out).

    block_batch: batch rows per grid step (128-aligned).  4096 is a safe v7x
      default (~17 MiB VMEM); raise to 8192+ on v6e/v5e (vmem limit is raised
      automatically when the estimate exceeds the scoped default).
    stream_dtype: dtype the activations are streamed in (f32 or bf16); all
      matmuls accumulate in f32 either way.
    """
    act_dtype = jnp.dtype(stream_dtype)
    act_itemsize = act_dtype.itemsize

    fc_params, (wf, bf) = params
    assert len(fc_params) >= 1, "expects at least one fc layer (layer_num >= 2)"

    batch = user.shape[0]
    du, di, dm = user.shape[1], item.shape[1], merge_retrieval.shape[1]

    w0, b0 = fc_params[0]
    assert w0.shape[0] == du + di + dm
    # Split W0 row-wise: concat(user,item,merge) @ W0 == u@W0u + i@W0i + m@W0m
    w0u, w0i, w0m = w0[:du], w0[du:du + di], w0[du + di:]
    wf_row = wf.T                        # (1, h_last)
    bf = bf.reshape(1, 1)

    # ---- batch tiling & padding ------------------------------------------
    tb, num_tiles = _pick_tile(batch, block_batch)
    padded_batch = num_tiles * tb

    user = user.astype(act_dtype)
    item = item.astype(act_dtype)
    merge_retrieval = merge_retrieval.astype(act_dtype)
    if padded_batch != batch:
        # Zero-pad so every tile computes on defined data (padded rows are
        # sliced off below); avoids stale-VMEM garbage in the ragged tile.
        pad = padded_batch - batch
        user = jnp.pad(user, ((0, pad), (0, 0)))
        item = jnp.pad(item, ((0, pad), (0, 0)))
        merge_retrieval = jnp.pad(merge_retrieval, ((0, pad), (0, 0)))

    # ---- flat operand list -------------------------------------------------
    rest = fc_params[1:]
    flat_inputs = [user, item, merge_retrieval,
                   w0u.astype(act_dtype), w0i.astype(act_dtype),
                   w0m.astype(act_dtype),
                   b0.reshape(1, -1).astype(jnp.float32)]
    for w, b in rest:
        flat_inputs += [w.astype(jnp.float32),
                        b.reshape(1, -1).astype(jnp.float32)]
    flat_inputs += [wf_row.astype(jnp.float32), bf.astype(jnp.float32)]

    def _act_spec(dim):
        return pl.BlockSpec((tb, dim), lambda i: (i, 0))

    def _resident_spec(arr):             # same block every step -> no re-DMA
        return pl.BlockSpec(arr.shape, lambda i: (0, 0))

    in_specs = [_act_spec(du), _act_spec(di), _act_spec(dm)]
    in_specs += [_resident_spec(a) for a in flat_inputs[3:]]
    out_spec = pl.BlockSpec((1, 1, tb), lambda i: (i, 0, 0))

    # ---- cost estimate (lane-padded / physical bytes) ----------------------
    layer_dims = [w0.shape] + [w.shape for w, _ in rest] + [wf.shape]
    flops = 2 * padded_batch * sum(int(m) * int(n) for m, n in layer_dims)
    streamed_bytes = sum(_padded_bytes_2d((padded_batch, d), act_itemsize)
                         for d in (du, di, dm))
    resident_bytes = sum(
        _padded_bytes_2d(a.shape, jnp.dtype(a.dtype).itemsize)
        for a in flat_inputs[3:])
    out_bytes = num_tiles * _round_up(1, 8) * _round_up(tb, 128) * 4
    bytes_accessed = streamed_bytes + resident_bytes + out_bytes

    # ---- VMEM budget: raise the scoped limit only when needed --------------
    per_row_bytes = (2 * act_itemsize * sum(_round_up(d, 128)
                                            for d in (du, di, dm))  # dbl-buf in
                     + 4 * sum(_round_up(int(w.shape[1]), 128)
                               for w, _ in fc_params)               # h temps
                     + 2 * 4)                                       # dbl-buf out
    vmem_est = tb * per_row_bytes + resident_bytes + (2 << 20)
    vmem_limit = None
    if vmem_est > 28 * (1 << 20):
        # Needed for TB >= ~8K on v6e/v5e; keep it well under physical VMEM.
        vmem_limit = int(min(vmem_est * 1.4, 100 * (1 << 20)))

    kernel = _make_mlp_kernel(len(rest))

    out = pl.pallas_call(
        kernel,
        out_shape=jax.ShapeDtypeStruct((num_tiles, 1, tb), jnp.float32),
        grid=(num_tiles,),
        in_specs=in_specs,
        out_specs=out_spec,
        compiler_params=pltpu.CompilerParams(
            dimension_semantics=("parallel",),
            vmem_limit_bytes=vmem_limit),
        cost_estimate=pl.CostEstimate(
            flops=flops, transcendentals=padded_batch,
            bytes_accessed=bytes_accessed),
    )(*flat_inputs)

    # (num_tiles, 1, tb) -> (padded_batch, 1); padded rows dropped.
    return out.reshape(padded_batch, 1)[:batch]


# --------------------------------------------------------------------------
# parameter init + pure-JAX reference
# --------------------------------------------------------------------------
def init_params(key, input_size, layer_num):
    """Deterministic init mirroring torch.nn.Linear (uniform(+-1/sqrt(fan_in)))."""
    fc_params = []
    last = input_size
    for _ in range(layer_num - 1):
        out_dim = last // 2
        key, kw, kb = jax.random.split(key, 3)
        bound = 1.0 / (last ** 0.5)
        w = jax.random.uniform(kw, (last, out_dim), jnp.float32, -bound, bound)
        b = jax.random.uniform(kb, (1, out_dim), jnp.float32, -bound, bound)
        fc_params.append((w, b))
        last = out_dim
    key, kw, kb = jax.random.split(key, 3)
    bound = 1.0 / (last ** 0.5)
    wf = jax.random.uniform(kw, (last, 1), jnp.float32, -bound, bound)
    bf = jax.random.uniform(kb, (1, 1), jnp.float32, -bound, bound)
    return fc_params, (wf, bf)


def reference_forward(user, item, merge_retrieval, params):
    """Pure-JAX reference for a sanity check."""
    x = jnp.concatenate([user, item, merge_retrieval], axis=-1)
    fc_params, (wf, bf) = params
    h = x.astype(jnp.float32)
    for w, b in fc_params:
        h = jnp.maximum(h @ w + b, 0.0)
    o = h @ wf + bf
    return jnp.exp(-(o * o))


# --------------------------------------------------------------------------
# smoke test
# --------------------------------------------------------------------------
if __name__ == "__main__":
    # Module config: emb_dim=8, dataset_type='AD' -> input_size = 8*14 = 112,
    # layer_num=3 -> fc: 112 -> 56 -> 28, final_layer: 28 -> 1, act='relu'.
    emb_dim = 8
    layer_num = 3
    input_size = emb_dim * 14                      # 112
    user_dim, item_dim, merge_dim = 6 * emb_dim, 4 * emb_dim, 4 * emb_dim

    batch = 256
    key = jax.random.PRNGKey(0)
    k_user, k_item, k_merge, k_params = jax.random.split(key, 4)
    user = jax.random.normal(k_user, (batch, user_dim), jnp.float32)
    item = jax.random.normal(k_item, (batch, item_dim), jnp.float32)
    merge_retrieval = jax.random.normal(k_merge, (batch, merge_dim), jnp.float32)

    params = init_params(k_params, input_size, layer_num)
    ref = reference_forward(user, item, merge_retrieval, params)

    # With batch=256 and the default block_batch=4096 the tile picker clamps
    # TB to 128 -> 2 grid tiles (exercises the batch grid, resident weights,
    # lane-dense (1, 128) output blocks and the megacore "parallel" axis).
    out = mlp_forward(user, item, merge_retrieval, params)
    jax.block_until_ready(out)
    assert out.shape == (batch, 1)
    assert jnp.allclose(out, ref, atol=1e-4, rtol=1e-4), (
        float(jnp.max(jnp.abs(out - ref))))

    # Optional bf16 activation streaming (halves input HBM bytes); looser
    # tolerance since the inputs are rounded to bf16 before the MXU.
    out_bf16 = mlp_forward(user, item, merge_retrieval, params,
                           stream_dtype=jnp.bfloat16)
    jax.block_until_ready(out_bf16)
    assert out_bf16.shape == (batch, 1)
    assert bool(jnp.all(jnp.isfinite(out_bf16)))
    assert jnp.allclose(out_bf16, ref, atol=2e-2), (
        float(jnp.max(jnp.abs(out_bf16 - ref))))

    print("KERNEL_OK")
</pallas_src>

<mosaic_0001>
module attributes {stable_mosaic.version = 11 : i64} {
  func.func @kernel(%arg0: i32, %arg1: memref<128x48xf32, #tpu.memory_space<vmem>>, %arg2: memref<128x32xf32, #tpu.memory_space<vmem>>, %arg3: memref<128x32xf32, #tpu.memory_space<vmem>>, %arg4: memref<48x56xf32, #tpu.memory_space<vmem>>, %arg5: memref<32x56xf32, #tpu.memory_space<vmem>>, %arg6: memref<32x56xf32, #tpu.memory_space<vmem>>, %arg7: memref<1x56xf32, #tpu.memory_space<vmem>>, %arg8: memref<56x28xf32, #tpu.memory_space<vmem>>, %arg9: memref<1x28xf32, #tpu.memory_space<vmem>>, %arg10: memref<1x28xf32, #tpu.memory_space<vmem>>, %arg11: memref<1x1xf32, #tpu.memory_space<vmem>>, %arg12: memref<1x1x128xf32, #tpu.memory_space<vmem>>) attributes {dimension_semantics = [#tpu.dimension_semantics<parallel>], iteration_bounds = array<i64: 2>, scalar_prefetch = 0 : i64, scratch_operands = 0 : i64, tpu.core_type = #tpu.core_type<tc>, window_params = [{transform_indices = @transform_0, window_bounds = array<i64: 128, 48>}, {transform_indices = @transform_1, window_bounds = array<i64: 128, 32>}, {transform_indices = @transform_2, window_bounds = array<i64: 128, 32>}, {pipeline_mode = #tpu.pipeline_mode<synchronous>, transform_indices = @transform_3, window_bounds = array<i64: 48, 56>}, {pipeline_mode = #tpu.pipeline_mode<synchronous>, transform_indices = @transform_4, window_bounds = array<i64: 32, 56>}, {pipeline_mode = #tpu.pipeline_mode<synchronous>, transform_indices = @transform_5, window_bounds = array<i64: 32, 56>}, {pipeline_mode = #tpu.pipeline_mode<synchronous>, transform_indices = @transform_6, window_bounds = array<i64: 1, 56>}, {pipeline_mode = #tpu.pipeline_mode<synchronous>, transform_indices = @transform_7, window_bounds = array<i64: 56, 28>}, {pipeline_mode = #tpu.pipeline_mode<synchronous>, transform_indices = @transform_8, window_bounds = array<i64: 1, 28>}, {pipeline_mode = #tpu.pipeline_mode<synchronous>, transform_indices = @transform_9, window_bounds = array<i64: 1, 28>}, {pipeline_mode = #tpu.pipeline_mode<synchronous>, transform_indices = @transform_10, window_bounds = array<i64: 1, 1>}, {transform_indices = @transform_11, window_bounds = array<i64: 1, 1, 128>}]} {
    %c0 = arith.constant 0 : index
    %c0_0 = arith.constant 0 : index
    %0 = vector.load %arg4[%c0, %c0_0] : memref<48x56xf32, #tpu.memory_space<vmem>>, vector<48x56xf32>
    %c0_1 = arith.constant 0 : index
    %c0_2 = arith.constant 0 : index
    %1 = vector.load %arg5[%c0_1, %c0_2] : memref<32x56xf32, #tpu.memory_space<vmem>>, vector<32x56xf32>
    %c0_3 = arith.constant 0 : index
    %c0_4 = arith.constant 0 : index
    %2 = vector.load %arg6[%c0_3, %c0_4] : memref<32x56xf32, #tpu.memory_space<vmem>>, vector<32x56xf32>
    %c0_5 = arith.constant 0 : index
    %c0_6 = arith.constant 0 : index
    %3 = vector.load %arg7[%c0_5, %c0_6] : memref<1x56xf32, #tpu.memory_space<vmem>>, vector<1x56xf32>
    %c0_7 = arith.constant 0 : index
    %c0_8 = arith.constant 0 : index
    %4 = vector.load %arg1[%c0_7, %c0_8] : memref<128x48xf32, #tpu.memory_space<vmem>>, vector<128x48xf32>
    %cst = arith.constant dense<0.000000e+00> : vector<128x56xf32>
    %5 = tpu.matmul %4, %0, %cst {dimension_numbers = #tpu.dot_dimension_numbers<[1], [0], [0], [1], [0, 0, 1, 1], [], []>} : vector<128x48xf32>, vector<48x56xf32>, vector<128x56xf32> -> vector<128x56xf32>
    %c0_9 = arith.constant 0 : index
    %c0_10 = arith.constant 0 : index
    %6 = vector.load %arg2[%c0_9, %c0_10] : memref<128x32xf32, #tpu.memory_space<vmem>>, vector<128x32xf32>
    %cst_11 = arith.constant dense<0.000000e+00> : vector<128x56xf32>
    %7 = tpu.matmul %6, %1, %cst_11 {dimension_numbers = #tpu.dot_dimension_numbers<[1], [0], [0], [1], [0, 0, 1, 1], [], []>} : vector<128x32xf32>, vector<32x56xf32>, vector<128x56xf32> -> vector<128x56xf32>
    %8 = arith.addf %5, %7 : vector<128x56xf32>
    %c0_12 = arith.constant 0 : index
    %c0_13 = arith.constant 0 : index
    %9 = vector.load %arg3[%c0_12, %c0_13] : memref<128x32xf32, #tpu.memory_space<vmem>>, vector<128x32xf32>
    %cst_14 = arith.constant dense<0.000000e+00> : vector<128x56xf32>
    %10 = tpu.matmul %9, %2, %cst_14 {dimension_numbers = #tpu.dot_dimension_numbers<[1], [0], [0], [1], [0, 0, 1, 1], [], []>} : vector<128x32xf32>, vector<32x56xf32>, vector<128x56xf32> -> vector<128x56xf32>
    %11 = arith.addf %8, %10 : vector<128x56xf32>
    %12 = vector.broadcast %3 : vector<1x56xf32> to vector<128x56xf32>
    %13 = arith.addf %11, %12 : vector<128x56xf32>
    %cst_15 = arith.constant 0.000000e+00 : f32
    %14 = vector.broadcast %cst_15 : f32 to vector<128x56xf32>
    %15 = arith.maximumf %13, %14 : vector<128x56xf32>
    %c0_16 = arith.constant 0 : index
    %c0_17 = arith.constant 0 : index
    %16 = vector.load %arg8[%c0_16, %c0_17] : memref<56x28xf32, #tpu.memory_space<vmem>>, vector<56x28xf32>
    %c0_18 = arith.constant 0 : index
    %c0_19 = arith.constant 0 : index
    %17 = vector.load %arg9[%c0_18, %c0_19] : memref<1x28xf32, #tpu.memory_space<vmem>>, vector<1x28xf32>
    %cst_20 = arith.constant dense<0.000000e+00> : vector<128x28xf32>
    %18 = tpu.matmul %15, %16, %cst_20 {dimension_numbers = #tpu.dot_dimension_numbers<[1], [0], [0], [1], [0, 0, 1, 1], [], []>} : vector<128x56xf32>, vector<56x28xf32>, vector<128x28xf32> -> vector<128x28xf32>
    %19 = vector.broadcast %17 : vector<1x28xf32> to vector<128x28xf32>
    %20 = arith.addf %18, %19 : vector<128x28xf32>
    %cst_21 = arith.constant 0.000000e+00 : f32
    %21 = vector.broadcast %cst_21 : f32 to vector<128x28xf32>
    %22 = arith.maximumf %20, %21 : vector<128x28xf32>
    %c0_22 = arith.constant 0 : index
    %c0_23 = arith.constant 0 : index
    %23 = vector.load %arg10[%c0_22, %c0_23] : memref<1x28xf32, #tpu.memory_space<vmem>>, vector<1x28xf32>
    %c0_24 = arith.constant 0 : index
    %c0_25 = arith.constant 0 : index
    %24 = vector.load %arg11[%c0_24, %c0_25] : memref<1x1xf32, #tpu.memory_space<vmem>>, vector<1x1xf32>
    %cst_26 = arith.constant dense<0.000000e+00> : vector<1x128xf32>
    %25 = tpu.matmul %23, %22, %cst_26 {dimension_numbers = #tpu.dot_dimension_numbers<[1], [1], [0], [0], [0, 0, 1, 0], [], []>} : vector<1x28xf32>, vector<128x28xf32>, vector<1x128xf32> -> vector<1x128xf32>
    %26 = vector.broadcast %24 : vector<1x1xf32> to vector<1x128xf32>
    %27 = arith.addf %25, %26 : vector<1x128xf32>
    %28 = arith.mulf %27, %27 : vector<1x128xf32>
    %cst_27 = arith.constant 0.000000e+00 : f32
    %29 = vector.broadcast %cst_27 : f32 to vector<1x128xf32>
    %30 = arith.subf %29, %28 : vector<1x128xf32>
    %31 = math.exp %30 : vector<1x128xf32>
    %32 = vector.shape_cast %31 : vector<1x128xf32> to vector<1x1x128xf32>
    %c0_28 = arith.constant 0 : index
    %c0_29 = arith.constant 0 : index
    %c0_30 = arith.constant 0 : index
    %33 = vector.load %arg12[%c0_28, %c0_29, %c0_30] : memref<1x1x128xf32, #tpu.memory_space<vmem>>, vector<1x1x128xf32>
    tpu.vector_store %arg12[%c0_28, %c0_29, %c0_30], %32 {strides = array<i32>} : memref<1x1x128xf32, #tpu.memory_space<vmem>>, vector<1x1x128xf32>,
    return
  }
  func.func @transform_0(%arg0: i32) -> (i32, i32) {
    %c0_i32 = arith.constant 0 : i32
    %c0_i32_0 = arith.constant 0 : i32
    return %arg0, %c0_i32 : i32, i32
  }
  func.func @transform_1(%arg0: i32) -> (i32, i32) {
    %c0_i32 = arith.constant 0 : i32
    %c0_i32_0 = arith.constant 0 : i32
    return %arg0, %c0_i32 : i32, i32
  }
  func.func @transform_2(%arg0: i32) -> (i32, i32) {
    %c0_i32 = arith.constant 0 : i32
    %c0_i32_0 = arith.constant 0 : i32
    return %arg0, %c0_i32 : i32, i32
  }
  func.func @transform_3(%arg0: i32) -> (i32, i32) {
    %c0_i32 = arith.constant 0 : i32
    %c0_i32_0 = arith.constant 0 : i32
    %c0_i32_1 = arith.constant 0 : i32
    return %c0_i32, %c0_i32_0 : i32, i32
  }
  func.func @transform_4(%arg0: i32) -> (i32, i32) {
    %c0_i32 = arith.constant 0 : i32
    %c0_i32_0 = arith.constant 0 : i32
    %c0_i32_1 = arith.constant 0 : i32
    return %c0_i32, %c0_i32_0 : i32, i32
  }
  func.func @transform_5(%arg0: i32) -> (i32, i32) {
    %c0_i32 = arith.constant 0 : i32
    %c0_i32_0 = arith.constant 0 : i32
    %c0_i32_1 = arith.constant 0 : i32
    return %c0_i32, %c0_i32_0 : i32, i32
  }
  func.func @transform_6(%arg0: i32) -> (i32, i32) {
    %c0_i32 = arith.constant 0 : i32
    %c0_i32_0 = arith.constant 0 : i32
    %c0_i32_1 = arith.constant 0 : i32
    return %c0_i32, %c0_i32_0 : i32, i32
  }
  func.func @transform_7(%arg0: i32) -> (i32, i32) {
    %c0_i32 = arith.constant 0 : i32
    %c0_i32_0 = arith.constant 0 : i32
    %c0_i32_1 = arith.constant 0 : i32
    return %c0_i32, %c0_i32_0 : i32, i32
  }
  func.func @transform_8(%arg0: i32) -> (i32, i32) {
    %c0_i32 = arith.constant 0 : i32
    %c0_i32_0 = arith.constant 0 : i32
    %c0_i32_1 = arith.constant 0 : i32
    return %c0_i32, %c0_i32_0 : i32, i32
  }
  func.func @transform_9(%arg0: i32) -> (i32, i32) {
    %c0_i32 = arith.constant 0 : i32
    %c0_i32_0 = arith.constant 0 : i32
    %c0_i32_1 = arith.constant 0 : i32
    return %c0_i32, %c0_i32_0 : i32, i32
  }
  func.func @transform_10(%arg0: i32) -> (i32, i32) {
    %c0_i32 = arith.constant 0 : i32
    %c0_i32_0 = arith.constant 0 : i32
    %c0_i32_1 = arith.constant 0 : i32
    return %c0_i32, %c0_i32_0 : i32, i32
  }
  func.func @transform_11(%arg0: i32) -> (i32, i32, i32) {
    %c0_i32 = arith.constant 0 : i32
    %c0_i32_0 = arith.constant 0 : i32
    %c0_i32_1 = arith.constant 0 : i32
    return %arg0, %c0_i32, %c0_i32_0 : i32, i32, i32
  }
}

</mosaic_0001>

<llo_original>
// kernel: tpu_custom_call.1
$region0: #{tpu_custom_call.1}
  #allocation0 [shape = 'u32[]', space=smem, size = 0x4, offset = 0x4, fixed_abs, tag = 'smem constant byte address 0x4 - core index']
  #allocation1 [shape = 'u32[144,128]{1,0:T(1,128)}', space=vmem, size = 0x12000, scoped, tag = 'internal scratch']
  #allocation2 [shape = 'f32[1,1]{1,0:T(1,128)S(1)}', space=vmem, size = 0x200, scoped, tag = 'scoped memory for tpu_custom_call.1']
  %s0 = inlined_call_operand.vmem [shape: f32[256,48], index: 0, kind: input, shape index: {}]
  %s1 = inlined_call_operand.vmem [shape: f32[256,32], index: 1, kind: input, shape index: {}]
  %s2 = inlined_call_operand.vmem [shape: f32[256,32], index: 2, kind: input, shape index: {}]
  %s3 = inlined_call_operand.vmem [shape: f32[48,56], index: 3, kind: input, shape index: {}]
  %s4 = inlined_call_operand.vmem [shape: f32[32,56], index: 4, kind: input, shape index: {}]
  %s5 = inlined_call_operand.vmem [shape: f32[32,56], index: 5, kind: input, shape index: {}]
  %s6 = inlined_call_operand.vmem [shape: f32[1,56], index: 6, kind: input, shape index: {}]
  %s7 = inlined_call_operand.vmem [shape: f32[56,28], index: 7, kind: input, shape index: {}]
  %s8 = inlined_call_operand.vmem [shape: f32[1,28], index: 8, kind: input, shape index: {}]
  %s9 = inlined_call_operand.vmem [shape: f32[1,28], index: 9, kind: input, shape index: {}]
  %s10 = inlined_call_operand.<no memory space> [shape: f32[1,1], index: 10, kind: input, shape index: {}]
  %s11 = inlined_call_operand.hbm [shape: f32[2,1,128], index: 11, kind: output, shape index: {}]
  %s12 = sld [smem:[#allocation0]]
  $region77: #{tpu_custom_call.1} parent=0
    _
  %s14 = ssub.s32 1, %s12
  %s15 = scalar_select 0, %s14, %s12
  %v16 = vstv %s10
  %17 = vst [vmem:[#allocation2] sm:$0x1] %v16
  $region1: #{tpu_custom_call.1} parent=0
    #allocation3 [shape = 'u8[1024]{0}', space=vmem, size = 0x400, scoped, tag = 'output window, operand 0']
    #allocation4 [shape = 's32[2]{0}', space=sflag, size = 0x8, scoped, tag = 'scoped memory for tpu_custom_call.1']
    %18 = vsyncpa [#allocation4], 0
    %s19 = scalar_lea.sflag [#allocation4], 1
    %20 = vsyncpa %s19, 0
    loop: start=0, step=1, limit=4
    $region2: #{tpu_custom_call.1} parent=1 // loop_pre_header
      _
    $region3: #{tpu_custom_call.1} parent=1 // loop_header
      %s22 = sphi 0, %s26
      %p23 = scmp.ge.s32.totalorder %s22, 4
      %s32 = sphi 0, %s34
      %s35 = sphi 0, %s32
      %s36 = sphi 0, %s35
      %s52 = sphi 0, %s36
      %s58 = sphi 0, %s60
      %s61 = sphi 0, %s58
      %s62 = sphi 0, %s61
      %s78 = sphi 0, %s62
      %s84 = sphi 0, %s86
      %s87 = sphi 0, %s84
      %s88 = sphi 0, %s87
      %s104 = sphi 0, %s88
      %s108 = sphi 0, %s108
      %s110 = sphi 0, %s108
      %s111 = sphi 0, %s110
      %s125 = sphi 0, %s111
      %s129 = sphi 0, %s129
      %s131 = sphi 0, %s129
      %s132 = sphi 0, %s131
      %s146 = sphi 0, %s132
      %s150 = sphi 0, %s150
      %s152 = sphi 0, %s150
      %s153 = sphi 0, %s152
      %s167 = sphi 0, %s153
      %s171 = sphi 0, %s171
      %s173 = sphi 0, %s171
      %s174 = sphi 0, %s173
      %s188 = sphi 0, %s174
      %s192 = sphi 0, %s192
      %s194 = sphi 0, %s192
      %s195 = sphi 0, %s194
      %s209 = sphi 0, %s195
      %s213 = sphi 0, %s213
      %s215 = sphi 0, %s213
      %s216 = sphi 0, %s215
      %s230 = sphi 0, %s216
      %s234 = sphi 0, %s234
      %s236 = sphi 0, %s234
      %s237 = sphi 0, %s236
      %s251 = sphi 0, %s237
      %s255 = sphi 0, %s255
      %s257 = sphi 0, %s255
      %s258 = sphi 0, %s257
      %s272 = sphi 0, %s258
      %s278 = sphi 0, %s280
      %s281 = sphi 0, %s278
      %s282 = sphi 0, %s281
      %s298 = sphi 0, %s282
    $region4: #{tpu_custom_call.1} parent=1 // loop_header_branch
      %25 = sbr.rel (%p23) target = $region8
    $region5: #{tpu_custom_call.1} parent=1 // loop_body
      %s27 = ssub.s32 %s22, 1
      %s28 = ssub.s32 %s22, 2
      %s29 = sadd.s32 %s22, 1
      %s30 = ssub.s32 %s22, %s29
      %p31 = scmp.eq.s32.totalorder %s30, 0
      %s33 = sadd.s32 %s32, 1
      %s34 = scalar_select %p31, %s32, %s33
      %p37 = pneg %p31
      %p38 = scmp.eq.s32.totalorder %s22, 1
      %p39 = por %p37, %p38
      %p40 = scmp.ne.s32.totalorder %s32, %s35
      %p41 = scmp.eq.s32.totalorder %s22, 0
      %p42 = por %p40, %p41
      %p43 = scmp.ne.s32.totalorder %s32, %s35
      %p44 = scmp.eq.s32.totalorder %s27, 1
      %p45 = por %p43, %p44
      %p46 = scmp.ne.s32.totalorder %s35, %s36
      %p47 = scmp.eq.s32.totalorder %s27, 0
      %p48 = por %p46, %p47
      %p49 = scmp.ne.s32.totalorder %s35, %s36
      %p50 = scmp.eq.s32.totalorder %s28, 1
      %p51 = por %p49, %p50
      %p53 = scmp.ne.s32.totalorder %s36, %s52
      %p54 = scmp.eq.s32.totalorder %s28, 0
      %p55 = por %p53, %p54
      %s56 = ssub.s32 %s22, %s29
      %p57 = scmp.eq.s32.totalorder %s56, 0
      %s59 = sadd.s32 %s58, 1
      %s60 = scalar_select %p57, %s58, %s59
      %p63 = pneg %p57
      %p64 = scmp.eq.s32.totalorder %s22, 1
      %p65 = por %p63, %p64
      %p66 = scmp.ne.s32.totalorder %s58, %s61
      %p67 = scmp.eq.s32.totalorder %s22, 0
      %p68 = por %p66, %p67
      %p69 = scmp.ne.s32.totalorder %s58, %s61
      %p70 = scmp.eq.s32.totalorder %s27, 1
      %p71 = por %p69, %p70
      %p72 = scmp.ne.s32.totalorder %s61, %s62
      %p73 = scmp.eq.s32.totalorder %s27, 0
      %p74 = por %p72, %p73
      %p75 = scmp.ne.s32.totalorder %s61, %s62
      %p76 = scmp.eq.s32.totalorder %s28, 1
      %p77 = por %p75, %p76
      %p79 = scmp.ne.s32.totalorder %s62, %s78
      %p80 = scmp.eq.s32.totalorder %s28, 0
      %p81 = por %p79, %p80
      %s82 = ssub.s32 %s22, %s29
      %p83 = scmp.eq.s32.totalorder %s82, 0
      %s85 = sadd.s32 %s84, 1
      %s86 = scalar_select %p83, %s84, %s85
      %p89 = pneg %p83
      %p90 = scmp.eq.s32.totalorder %s22, 1
      %p91 = por %p89, %p90
      %p92 = scmp.ne.s32.totalorder %s84, %s87
      %p93 = scmp.eq.s32.totalorder %s22, 0
      %p94 = por %p92, %p93
      %p95 = scmp.ne.s32.totalorder %s84, %s87
      %p96 = scmp.eq.s32.totalorder %s27, 1
      %p97 = por %p95, %p96
      %p98 = scmp.ne.s32.totalorder %s87, %s88
      %p99 = scmp.eq.s32.totalorder %s27, 0
      %p100 = por %p98, %p99
      %p101 = scmp.ne.s32.totalorder %s87, %s88
      %p102 = scmp.eq.s32.totalorder %s28, 1
      %p103 = por %p101, %p102
      %p105 = scmp.ne.s32.totalorder %s88, %s104
      %p106 = scmp.eq.s32.totalorder %s28, 0
      %p107 = por %p105, %p106
      %s109 = sadd.s32 %s108, 1
      %p112 = scmp.eq.s32.totalorder %s22, 1
      %p113 = scmp.ne.s32.totalorder %s108, %s110
      %p114 = scmp.eq.s32.totalorder %s22, 0
      %p115 = por %p113, %p114
      %p116 = scmp.ne.s32.totalorder %s108, %s110
      %p117 = scmp.eq.s32.totalorder %s27, 1
      %p118 = por %p116, %p117
      %p119 = scmp.ne.s32.totalorder %s110, %s111
      %p120 = scmp.eq.s32.totalorder %s27, 0
      %p121 = por %p119, %p120
      %p122 = scmp.ne.s32.totalorder %s110, %s111
      %p123 = scmp.eq.s32.totalorder %s28, 1
      %p124 = por %p122, %p123
      %p126 = scmp.ne.s32.totalorder %s111, %s125
      %p127 = scmp.eq.s32.totalorder %s28, 0
      %p128 = por %p126, %p127
      %s130 = sadd.s32 %s129, 1
      %p133 = scmp.eq.s32.totalorder %s22, 1
      %p134 = scmp.ne.s32.totalorder %s129, %s131
      %p135 = scmp.eq.s32.totalorder %s22, 0
      %p136 = por %p134, %p135
      %p137 = scmp.ne.s32.totalorder %s129, %s131
      %p138 = scmp.eq.s32.totalorder %s27, 1
      %p139 = por %p137, %p138
      %p140 = scmp.ne.s32.totalorder %s131, %s132
      %p141 = scmp.eq.s32.totalorder %s27, 0
      %p142 = por %p140, %p141
      %p143 = scmp.ne.s32.totalorder %s131, %s132
      %p144 = scmp.eq.s32.totalorder %s28, 1
      %p145 = por %p143, %p144
      %p147 = scmp.ne.s32.totalorder %s132, %s146
      %p148 = scmp.eq.s32.totalorder %s28, 0
      %p149 = por %p147, %p148
      %s151 = sadd.s32 %s150, 1
      %p154 = scmp.eq.s32.totalorder %s22, 1
      %p155 = scmp.ne.s32.totalorder %s150, %s152
      %p156 = scmp.eq.s32.totalorder %s22, 0
      %p157 = por %p155, %p156
      %p158 = scmp.ne.s32.totalorder %s150, %s152
      %p159 = scmp.eq.s32.totalorder %s27, 1
      %p160 = por %p158, %p159
      %p161 = scmp.ne.s32.totalorder %s152, %s153
      %p162 = scmp.eq.s32.totalorder %s27, 0
      %p163 = por %p161, %p162
      %p164 = scmp.ne.s32.totalorder %s152, %s153
      %p165 = scmp.eq.s32.totalorder %s28, 1
      %p166 = por %p164, %p165
      %p168 = scmp.ne.s32.totalorder %s153, %s167
      %p169 = scmp.eq.s32.totalorder %s28, 0
      %p170 = por %p168, %p169
      %s172 = sadd.s32 %s171, 1
      %p175 = scmp.eq.s32.totalorder %s22, 1
      %p176 = scmp.ne.s32.totalorder %s171, %s173
      %p177 = scmp.eq.s32.totalorder %s22, 0
      %p178 = por %p176, %p177
      %p179 = scmp.ne.s32.totalorder %s171, %s173
      %p180 = scmp.eq.s32.totalorder %s27, 1
      %p181 = por %p179, %p180
      %p182 = scmp.ne.s32.totalorder %s173, %s174
      %p183 = scmp.eq.s32.totalorder %s27, 0
      %p184 = por %p182, %p183
      %p185 = scmp.ne.s32.totalorder %s173, %s174
      %p186 = scmp.eq.s32.totalorder %s28, 1
      %p187 = por %p185, %p186
      %p189 = scmp.ne.s32.totalorder %s174, %s188
      %p190 = scmp.eq.s32.totalorder %s28, 0
      %p191 = por %p189, %p190
      %s193 = sadd.s32 %s192, 1
      %p196 = scmp.eq.s32.totalorder %s22, 1
      %p197 = scmp.ne.s32.totalorder %s192, %s194
      %p198 = scmp.eq.s32.totalorder %s22, 0
      %p199 = por %p197, %p198
      %p200 = scmp.ne.s32.totalorder %s192, %s194
      %p201 = scmp.eq.s32.totalorder %s27, 1
      %p202 = por %p200, %p201
      %p203 = scmp.ne.s32.totalorder %s194, %s195
      %p204 = scmp.eq.s32.totalorder %s27, 0
      %p205 = por %p203, %p204
      %p206 = scmp.ne.s32.totalorder %s194, %s195
      %p207 = scmp.eq.s32.totalorder %s28, 1
      %p208 = por %p206, %p207
      %p210 = scmp.ne.s32.totalorder %s195, %s209
      %p211 = scmp.eq.s32.totalorder %s28, 0
      %p212 = por %p210, %p211
      %s214 = sadd.s32 %s213, 1
      %p217 = scmp.eq.s32.totalorder %s22, 1
      %p218 = scmp.ne.s32.totalorder %s213, %s215
      %p219 = scmp.eq.s32.totalorder %s22, 0
      %p220 = por %p218, %p219
      %p221 = scmp.ne.s32.totalorder %s213, %s215
      %p222 = scmp.eq.s32.totalorder %s27, 1
      %p223 = por %p221, %p222
      %p224 = scmp.ne.s32.totalorder %s215, %s216
      %p225 = scmp.eq.s32.totalorder %s27, 0
      %p226 = por %p224, %p225
      %p227 = scmp.ne.s32.totalorder %s215, %s216
      %p228 = scmp.eq.s32.totalorder %s28, 1
      %p229 = por %p227, %p228
      %p231 = scmp.ne.s32.totalorder %s216, %s230
      %p232 = scmp.eq.s32.totalorder %s28, 0
      %p233 = por %p231, %p232
      %s235 = sadd.s32 %s234, 1
      %p238 = scmp.eq.s32.totalorder %s22, 1
      %p239 = scmp.ne.s32.totalorder %s234, %s236
      %p240 = scmp.eq.s32.totalorder %s22, 0
      %p241 = por %p239, %p240
      %p242 = scmp.ne.s32.totalorder %s234, %s236
      %p243 = scmp.eq.s32.totalorder %s27, 1
      %p244 = por %p242, %p243
      %p245 = scmp.ne.s32.totalorder %s236, %s237
      %p246 = scmp.eq.s32.totalorder %s27, 0
      %p247 = por %p245, %p246
      %p248 = scmp.ne.s32.totalorder %s236, %s237
      %p249 = scmp.eq.s32.totalorder %s28, 1
      %p250 = por %p248, %p249
      %p252 = scmp.ne.s32.totalorder %s237, %s251
      %p253 = scmp.eq.s32.totalorder %s28, 0
      %p254 = por %p252, %p253
      %s256 = sadd.s32 %s255, 1
      %p259 = scmp.eq.s32.totalorder %s22, 1
      %p260 = scmp.ne.s32.totalorder %s255, %s257
      %p261 = scmp.eq.s32.totalorder %s22, 0
      %p262 = por %p260, %p261
      %p263 = scmp.ne.s32.totalorder %s255, %s257
      %p264 = scmp.eq.s32.totalorder %s27, 1
      %p265 = por %p263, %p264
      %p266 = scmp.ne.s32.totalorder %s257, %s258
      %p267 = scmp.eq.s32.totalorder %s27, 0
      %p268 = por %p266, %p267
      %p269 = scmp.ne.s32.totalorder %s257, %s258
      %p270 = scmp.eq.s32.totalorder %s28, 1
      %p271 = por %p269, %p270
      %p273 = scmp.ne.s32.totalorder %s258, %s272
      %p274 = scmp.eq.s32.totalorder %s28, 0
      %p275 = por %p273, %p274
      %s276 = ssub.s32 %s22, %s29
      %p277 = scmp.eq.s32.totalorder %s276, 0
      %s279 = sadd.s32 %s278, 1
      %s280 = scalar_select %p277, %s278, %s279
      %p283 = pneg %p277
      %p284 = scmp.eq.s32.totalorder %s22, 1
      %p285 = por %p283, %p284
      %p286 = scmp.ne.s32.totalorder %s278, %s281
      %p287 = scmp.eq.s32.totalorder %s22, 0
      %p288 = por %p286, %p287
      %p289 = scmp.ne.s32.totalorder %s278, %s281
      %p290 = scmp.eq.s32.totalorder %s27, 1
      %p291 = por %p289, %p290
      %p292 = scmp.ne.s32.totalorder %s281, %s282
      %p293 = scmp.eq.s32.totalorder %s27, 0
      %p294 = por %p292, %p293
      %p295 = scmp.ne.s32.totalorder %s281, %s282
      %p296 = scmp.eq.s32.totalorder %s28, 1
      %p297 = por %p295, %p296
      %p299 = scmp.ne.s32.totalorder %s282, %s298
      %p300 = scmp.eq.s32.totalorder %s28, 0
      %p301 = por %p299, %p300
      %p302 = scmp.le.s32.totalorder 1, %s22
      %p303 = scmp.lt.s32.totalorder %s22, 3
      %p304 = pnand %p302, %p303
      %p305 = pneg %p304
      // Predicated region
      $region9: #{tpu_custom_call.1} parent=5 // pred_check
        _
      $region10: #{tpu_custom_call.1} parent=5 // pred_check_branch
        %307 = sbr.rel (%p304) target = $region12
      $region11: #{tpu_custom_call.1} parent=5 // pred_region
        %s308 = ssub.s32 %s22, 1
        // Predicated region
        $region13: #{tpu_custom_call.1} parent=11 // pred_check
          %p309 = pneg %p121
        $region14: #{tpu_custom_call.1} parent=11 // pred_check_branch
          %311 = sbr.rel (%p309) target = $region16
        $region15: #{tpu_custom_call.1} parent=11 // pred_region
          _
        $region16: #{tpu_custom_call.1} parent=11 // pred_fallthru
          _
        // Predicated region
        $region17: #{tpu_custom_call.1} parent=11 // pred_check
          %p312 = pneg %p142
        $region18: #{tpu_custom_call.1} parent=11 // pred_check_branch
          %314 = sbr.rel (%p312) target = $region20
        $region19: #{tpu_custom_call.1} parent=11 // pred_region
          _
        $region20: #{tpu_custom_call.1} parent=11 // pred_fallthru
          _
        // Predicated region
        $region21: #{tpu_custom_call.1} parent=11 // pred_check
          %p315 = pneg %p163
        $region22: #{tpu_custom_call.1} parent=11 // pred_check_branch
          %317 = sbr.rel (%p315) target = $region24
        $region23: #{tpu_custom_call.1} parent=11 // pred_region
          _
        $region24: #{tpu_custom_call.1} parent=11 // pred_fallthru
          _
        // Predicated region
        $region25: #{tpu_custom_call.1} parent=11 // pred_check
          %p318 = pneg %p184
        $region26: #{tpu_custom_call.1} parent=11 // pred_check_branch
          %320 = sbr.rel (%p318) target = $region28
        $region27: #{tpu_custom_call.1} parent=11 // pred_region
          _
        $region28: #{tpu_custom_call.1} parent=11 // pred_fallthru
          _
        // Predicated region
        $region29: #{tpu_custom_call.1} parent=11 // pred_check
          %p321 = pneg %p205
        $region30: #{tpu_custom_call.1} parent=11 // pred_check_branch
          %323 = sbr.rel (%p321) target = $region32
        $region31: #{tpu_custom_call.1} parent=11 // pred_region
          _
        $region32: #{tpu_custom_call.1} parent=11 // pred_fallthru
          _
        // Predicated region
        $region33: #{tpu_custom_call.1} parent=11 // pred_check
          %p324 = pneg %p226
        $region34: #{tpu_custom_call.1} parent=11 // pred_check_branch
          %326 = sbr.rel (%p324) target = $region36
        $region35: #{tpu_custom_call.1} parent=11 // pred_region
          _
        $region36: #{tpu_custom_call.1} parent=11 // pred_fallthru
          _
        // Predicated region
        $region37: #{tpu_custom_call.1} parent=11 // pred_check
          %p327 = pneg %p247
        $region38: #{tpu_custom_call.1} parent=11 // pred_check_branch
          %329 = sbr.rel (%p327) target = $region40
        $region39: #{tpu_custom_call.1} parent=11 // pred_region
          _
        $region40: #{tpu_custom_call.1} parent=11 // pred_fallthru
          _
        // Predicated region
        $region41: #{tpu_custom_call.1} parent=11 // pred_check
          %p330 = pneg %p268
        $region42: #{tpu_custom_call.1} parent=11 // pred_check_branch
          %332 = sbr.rel (%p330) target = $region44
        $region43: #{tpu_custom_call.1} parent=11 // pred_region
          _
        $region44: #{tpu_custom_call.1} parent=11 // pred_fallthru
          _
      $region12: #{tpu_custom_call.1} parent=5 // pred_fallthru
        _
      %p333 = scmp.lt.s32.totalorder %s22, 2
      // Predicated region
      $region45: #{tpu_custom_call.1} parent=5 // pred_check
        %p334 = pneg %p333
      $region46: #{tpu_custom_call.1} parent=5 // pred_check_branch
        %336 = sbr.rel (%p334) target = $region48
      $region47: #{tpu_custom_call.1} parent=5 // pred_region
        // Predicated region
        $region49: #{tpu_custom_call.1} parent=47 // pred_check
          %p337 = pneg %p42
        $region50: #{tpu_custom_call.1} parent=47 // pred_check_branch
          %339 = sbr.rel (%p337) target = $region52
        $region51: #{tpu_custom_call.1} parent=47 // pred_region
          %s340 = smul.u32 16, %s22
          %p341 = scmp.lt.s32.totalorder %s340, 31
          %s342 = scalar_select %p341, %s340, 31
          %s343 = smul.addr %s342, 8
          %s344 = scalar_lea.vmem %s0, %s343
          %s345 = smul.u32 16, %s22
        $region52: #{tpu_custom_call.1} parent=47 // pred_fallthru
          _
        // Predicated region
        $region53: #{tpu_custom_call.1} parent=47 // pred_check
          %p346 = pneg %p68
        $region54: #{tpu_custom_call.1} parent=47 // pred_check_branch
          %348 = sbr.rel (%p346) target = $region56
        $region55: #{tpu_custom_call.1} parent=47 // pred_region
          %s349 = smul.u32 16, %s22
          %p350 = scmp.lt.s32.totalorder %s349, 31
          %s351 = scalar_select %p350, %s349, 31
          %s352 = smul.addr %s351, 8
          %s353 = scalar_lea.vmem %s1, %s352
          %s354 = smul.u32 16, %s22
        $region56: #{tpu_custom_call.1} parent=47 // pred_fallthru
          _
        // Predicated region
        $region57: #{tpu_custom_call.1} parent=47 // pred_check
          %p355 = pneg %p94
        $region58: #{tpu_custom_call.1} parent=47 // pred_check_branch
          %357 = sbr.rel (%p355) target = $region60
        $region59: #{tpu_custom_call.1} parent=47 // pred_region
          %s358 = smul.u32 16, %s22
          %p359 = scmp.lt.s32.totalorder %s358, 31
          %s360 = scalar_select %p359, %s358, 31
          %s361 = smul.addr %s360, 8
          %s362 = scalar_lea.vmem %s2, %s361
          %s363 = smul.u32 16, %s22
        $region60: #{tpu_custom_call.1} parent=47 // pred_fallthru
          _
      $region48: #{tpu_custom_call.1} parent=5 // pred_fallthru
        _
      %p364 = scmp.le.s32.totalorder 1, %s22
      %p365 = scmp.lt.s32.totalorder %s22, 3
      %p366 = pnand %p364, %p365
      %p367 = pneg %p366
      // Predicated region
      $region61: #{tpu_custom_call.1} parent=5 // pred_check
        _
      $region62: #{tpu_custom_call.1} parent=5 // pred_check_branch
        %369 = sbr.rel (%p366) target = $region64
      $region63: #{tpu_custom_call.1} parent=5 // pred_region
        %s370 = ssub.s32 %s22, 1
        %s371 = smul.u32 16, %s27
        %p372 = scmp.lt.s32.totalorder %s371, 31
        %s373 = scalar_select %p372, %s371, 31
        %s374 = smul.addr %s373, 8
        %s375 = scalar_lea.vmem %s0, %s374
        %p376 = pneg %p48
        %p377 = pneg %p45
        %s378 = smul.u32 16, %s27
        %p379 = scmp.lt.s32.totalorder %s378, 31
        %s380 = scalar_select %p379, %s378, 31
        %s381 = smul.addr %s380, 8
        %s382 = scalar_lea.vmem %s1, %s381
        %p383 = pneg %p74
        %p384 = pneg %p71
        %s385 = smul.u32 16, %s27
        %p386 = scmp.lt.s32.totalorder %s385, 31
        %s387 = scalar_select %p386, %s385, 31
        %s388 = smul.addr %s387, 8
        %s389 = scalar_lea.vmem %s2, %s388
        %p390 = pneg %p100
        %p391 = pneg %p97
        %p392 = pneg %p121
        %p393 = pneg %p118
        %p394 = pneg %p142
        %p395 = pneg %p139
        %p396 = pneg %p163
        %p397 = pneg %p160
        %p398 = pneg %p184
        %p399 = pneg %p181
        %p400 = pneg %p205
        %p401 = pneg %p202
        %p402 = pneg %p226
        %p403 = pneg %p223
        %p404 = pneg %p247
        %p405 = pneg %p244
        %p406 = pneg %p268
        %p407 = pneg %p265
        %p408 = pneg %p294
        %p409 = pneg %p291
        %s410 = sand.u32 %s281, 1
        %s411 = scalar_lea.sflag [#allocation4], %s410
        %s412 = sand.u32 %s281, 1
        %s413 = scalar_lea.vmem [#allocation3], %s412
        %s414 = smul.u32 16, %s27
        %p415 = scmp.lt.s32.totalorder %s414, 31
        %s416 = scalar_select %p415, %s414, 31
        %s417 = smul.addr %s416, 8
        %s418 = scalar_lea.vmem %s0, %s417
        %s419 = smul.u32 16, %s27
        %s420 = smul.u32 16, %s27
        %p421 = scmp.lt.s32.totalorder %s420, 31
        %s422 = scalar_select %p421, %s420, 31
        %s423 = smul.addr %s422, 8
        %s424 = scalar_lea.vmem %s1, %s423
        %s425 = smul.u32 16, %s27
        %s426 = smul.u32 16, %s27
        %p427 = scmp.lt.s32.totalorder %s426, 31
        %s428 = scalar_select %p427, %s426, 31
        %s429 = smul.addr %s428, 8
        %s430 = scalar_lea.vmem %s2, %s429
        %s431 = smul.u32 16, %s27
        %v432 = vld [vmem:[%s3] sm:$0xff]
        %v433 = vld [vmem:[%s3 + $0x8] sm:$0xff]
        %v434 = vld [vmem:[%s3 + $0x10] sm:$0xff]
        %v435 = vld [vmem:[%s3 + $0x18] sm:$0xff]
        %v436 = vld [vmem:[%s3 + $0x20] sm:$0xff]
        %v437 = vld [vmem:[%s3 + $0x28] sm:$0xff]
        %v438 = vld [vmem:[%s4] sm:$0xff]
        %v439 = vld [vmem:[%s4 + $0x8] sm:$0xff]
        %v440 = vld [vmem:[%s4 + $0x10] sm:$0xff]
        %v441 = vld [vmem:[%s4 + $0x18] sm:$0xff]
        %v442 = vld [vmem:[%s5] sm:$0xff]
        %v443 = vld [vmem:[%s5 + $0x8] sm:$0xff]
        %v444 = vld [vmem:[%s5 + $0x10] sm:$0xff]
        %v445 = vld [vmem:[%s5 + $0x18] sm:$0xff]
        %v446 = vld [vmem:[%s6] sm:$0x1]
        %v447 = vld [vmem:[%s418] sm:$0xff]
        %v448 = vld [vmem:[%s418 + $0x8] sm:$0xff]
        %v449 = vld [vmem:[%s418 + $0x10] sm:$0xff]
        %v450 = vld [vmem:[%s418 + $0x18] sm:$0xff]
        %v451 = vld [vmem:[%s418 + $0x20] sm:$0xff]
        %v452 = vld [vmem:[%s418 + $0x28] sm:$0xff]
        %v453 = vld [vmem:[%s418 + $0x30] sm:$0xff]
        %v454 = vld [vmem:[%s418 + $0x38] sm:$0xff]
        %v455 = vld [vmem:[%s418 + $0x40] sm:$0xff]
        %v456 = vld [vmem:[%s418 + $0x48] sm:$0xff]
        %v457 = vld [vmem:[%s418 + $0x50] sm:$0xff]
        %v458 = vld [vmem:[%s418 + $0x58] sm:$0xff]
        %v459 = vld [vmem:[%s418 + $0x60] sm:$0xff]
        %v460 = vld [vmem:[%s418 + $0x68] sm:$0xff]
        %v461 = vld [vmem:[%s418 + $0x70] sm:$0xff]
        %v462 = vld [vmem:[%s418 + $0x78] sm:$0xff]
        %v463 = vld [vmem:[%s424] sm:$0xff]
        %v464 = vld [vmem:[%s424 + $0x8] sm:$0xff]
        %v465 = vld [vmem:[%s424 + $0x10] sm:$0xff]
        %v466 = vld [vmem:[%s424 + $0x18] sm:$0xff]
        %v467 = vld [vmem:[%s424 + $0x20] sm:$0xff]
        %v468 = vld [vmem:[%s424 + $0x28] sm:$0xff]
        %v469 = vld [vmem:[%s424 + $0x30] sm:$0xff]
        %v470 = vld [vmem:[%s424 + $0x38] sm:$0xff]
        %v471 = vld [vmem:[%s424 + $0x40] sm:$0xff]
        %v472 = vld [vmem:[%s424 + $0x48] sm:$0xff]
        %v473 = vld [vmem:[%s424 + $0x50] sm:$0xff]
        %v474 = vld [vmem:[%s424 + $0x58] sm:$0xff]
        %v475 = vld [vmem:[%s424 + $0x60] sm:$0xff]
        %v476 = vld [vmem:[%s424 + $0x68] sm:$0xff]
        %v477 = vld [vmem:[%s424 + $0x70] sm:$0xff]
        %v478 = vld [vmem:[%s424 + $0x78] sm:$0xff]
        %vm479 = vcmask 261120
        %v481 = vsel %vm479, %v463, 0
        %v484 = vsel %vm479, %v464, 0
        %v487 = vsel %vm479, %v465, 0
        %v490 = vsel %vm479, %v466, 0
        %v493 = vsel %vm479, %v467, 0
        %v496 = vsel %vm479, %v468, 0
        %v499 = vsel %vm479, %v469, 0
        %v502 = vsel %vm479, %v470, 0
        %v505 = vsel %vm479, %v471, 0
        %v508 = vsel %vm479, %v472, 0
        %v511 = vsel %vm479, %v473, 0
        %v514 = vsel %vm479, %v474, 0
        %v517 = vsel %vm479, %v475, 0
        %v520 = vsel %vm479, %v476, 0
        %v523 = vsel %vm479, %v477, 0
        %v526 = vsel %vm479, %v478, 0
        %528 = vmatprep.subr.mxu0 0.0
        %529 = vmatpush1.msra.mxu0 0.0
        %530 = vmatprep.subr.mxu0 0.0
        %531 = vmatpush1.msra.mxu0 0.0
        %532 = vmatprep.subr.mxu0 0.0
        %533 = vmatpush1.msra.mxu0 0.0
        %534 = vmatprep.subr.mxu0 0.0
        %535 = vmatpush1.msra.mxu0 0.0
        %536 = vmatprep.subr.mxu0 0.0
        %537 = vmatpush1.msra.mxu0 0.0
        %538 = vmatprep.subr.mxu0 0.0
        %539 = vmatpush1.msra.mxu0 0.0
        %540 = vmatprep.subr.mxu0 0.0
        %541 = vmatpush1.msra.mxu0 0.0
        %542 = vmatprep.subr.mxu0 0.0
        %543 = vmatpush1.msra.mxu0 0.0
        %544 = vmatprep.subr.mxu0 0.0
        %545 = vmatpush1.msra.mxu0 0.0
        %546 = vmatprep.subr.mxu0 0.0
        %547 = vmatpush1.msra.mxu0 0.0
        %548 = vmatprep.subr.mxu0 0.0
        %549 = vmatpush1.msra.mxu0 0.0
        %550 = vmatprep.subr.mxu0 0.0
        %551 = vmatpush1.msra.mxu0 0.0
        %552 = vmatprep.subr.mxu0 0.0
        %553 = vmatpush1.msra.mxu0 %v441
        %554 = vmatprep.subr.mxu0 0.0
        %555 = vmatpush1.msra.mxu0 %v440
        %556 = vmatprep.subr.mxu0 0.0
        %557 = vmatpush1.msra.mxu0 %v439
        %558 = vmatprep.subr.mxu0 0.0
        %559 = vmatpush1.msra.mxu0 %v438
        %560 = vmatprep.subr.mxu0 0.0
        %561 = vmatpush2.msra.mxu0 0.0
        %562 = vmatprep.subr.mxu0 0.0
        %563 = vmatpush2.msra.mxu0 0.0
        %564 = vmatprep.subr.mxu0 0.0
        %565 = vmatpush2.msra.mxu0 0.0
        %566 = vmatprep.subr.mxu0 0.0
        %567 = vmatpush2.msra.mxu0 0.0
        %568 = vmatprep.subr.mxu0 0.0
        %569 = vmatpush2.msra.mxu0 0.0
        %570 = vmatprep.subr.mxu0 0.0
        %571 = vmatpush2.msra.mxu0 0.0
        %572 = vmatprep.subr.mxu0 0.0
        %573 = vmatpush2.msra.mxu0 0.0
        %574 = vmatprep.subr.mxu0 0.0
        %575 = vmatpush2.msra.mxu0 0.0
        %576 = vmatprep.subr.mxu0 0.0
        %577 = vmatpush2.msra.mxu0 0.0
        %578 = vmatprep.subr.mxu0 0.0
        %579 = vmatpush2.msra.mxu0 0.0
        %580 = vmatprep.subr.mxu0 0.0
        %581 = vmatpush2.msra.mxu0 0.0
        %582 = vmatprep.subr.mxu0 0.0
        %583 = vmatpush2.msra.mxu0 0.0
        %584 = vmatprep.subr.mxu0 0.0
        %585 = vmatpush2.msra.mxu0 0.0
        %586 = vmatprep.subr.mxu0 0.0
        %587 = vmatpush2.msra.mxu0 0.0
        %588 = vmatprep.subr.mxu0 0.0
        %589 = vmatpush2.msra.mxu0 0.0
        %590 = vmatprep.subr.mxu0 0.0
        %591 = vmatpush2.msra.mxu0 0.0
        %592 = vmatprep.mubr.f32.mxu0 0.0
        %593 = vmatmul.mubr.f32.gmra.mxu0 %v481
        %v594 = vpop.f32.mrf.mxu0
        %v595 = vadd.f32 0.0, %v594
        %v596 = vpop.f32.mrf.mxu0
        %597 = vmatprep.mubr.f32.mxu0 0.0
        %598 = vmatmul.mubr.f32.gmra.mxu0 %v484
        %v599 = vpop.f32.mrf.mxu0
        %v600 = vadd.f32 0.0, %v599
        %v601 = vpop.f32.mrf.mxu0
        %602 = vmatprep.mubr.f32.mxu0 0.0
        %603 = vmatmul.mubr.f32.gmra.mxu0 %v487
        %v604 = vpop.f32.mrf.mxu0
        %v605 = vadd.f32 0.0, %v604
        %v606 = vpop.f32.mrf.mxu0
        %607 = vmatprep.mubr.f32.mxu0 0.0
        %608 = vmatmul.mubr.f32.gmra.mxu0 %v490
        %v609 = vpop.f32.mrf.mxu0
        %v610 = vadd.f32 0.0, %v609
        %v611 = vpop.f32.mrf.mxu0
        %612 = vmatprep.mubr.f32.mxu0 0.0
        %613 = vmatmul.mubr.f32.gmra.mxu0 %v493
        %v614 = vpop.f32.mrf.mxu0
        %v615 = vadd.f32 0.0, %v614
        %v616 = vpop.f32.mrf.mxu0
        %617 = vmatprep.mubr.f32.mxu0 0.0
        %618 = vmatmul.mubr.f32.gmra.mxu0 %v496
        %v619 = vpop.f32.mrf.mxu0
        %v620 = vadd.f32 0.0, %v619
        %v621 = vpop.f32.mrf.mxu0
        %622 = vmatprep.mubr.f32.mxu0 0.0
        %623 = vmatmul.mubr.f32.gmra.mxu0 %v499
        %v624 = vpop.f32.mrf.mxu0
        %v625 = vadd.f32 0.0, %v624
        %v626 = vpop.f32.mrf.mxu0
        %627 = vmatprep.mubr.f32.mxu0 0.0
        %628 = vmatmul.mubr.f32.gmra.mxu0 %v502
        %v629 = vpop.f32.mrf.mxu0
        %v630 = vadd.f32 0.0, %v629
        %v631 = vpop.f32.mrf.mxu0
        %632 = vmatprep.mubr.f32.mxu0 0.0
        %633 = vmatmul.mubr.f32.gmra.mxu0 %v505
        %v634 = vpop.f32.mrf.mxu0
        %v635 = vadd.f32 0.0, %v634
        %v636 = vpop.f32.mrf.mxu0
        %637 = vmatprep.mubr.f32.mxu0 0.0
        %638 = vmatmul.mubr.f32.gmra.mxu0 %v508
        %v639 = vpop.f32.mrf.mxu0
        %v640 = vadd.f32 0.0, %v639
        %v641 = vpop.f32.mrf.mxu0
        %642 = vmatprep.mubr.f32.mxu0 0.0
        %643 = vmatmul.mubr.f32.gmra.mxu0 %v511
        %v644 = vpop.f32.mrf.mxu0
        %v645 = vadd.f32 0.0, %v644
        %v646 = vpop.f32.mrf.mxu0
        %647 = vmatprep.mubr.f32.mxu0 0.0
        %648 = vmatmul.mubr.f32.gmra.mxu0 %v514
        %v649 = vpop.f32.mrf.mxu0
        %v650 = vadd.f32 0.0, %v649
        %v651 = vpop.f32.mrf.mxu0
        %652 = vmatprep.mubr.f32.mxu0 0.0
        %653 = vmatmul.mubr.f32.gmra.mxu0 %v517
        %v654 = vpop.f32.mrf.mxu0
        %v655 = vadd.f32 0.0, %v654
        %v656 = vpop.f32.mrf.mxu0
        %657 = vmatprep.mubr.f32.mxu0 0.0
        %658 = vmatmul.mubr.f32.gmra.mxu0 %v520
        %v659 = vpop.f32.mrf.mxu0
        %v660 = vadd.f32 0.0, %v659
        %v661 = vpop.f32.mrf.mxu0
        %662 = vmatprep.mubr.f32.mxu0 0.0
        %663 = vmatmul.mubr.f32.gmra.mxu0 %v523
        %v664 = vpop.f32.mrf.mxu0
        %v665 = vadd.f32 0.0, %v664
        %v666 = vpop.f32.mrf.mxu0
        %667 = vmatprep.mubr.f32.mxu0 0.0
        %668 = vmatmul.mubr.f32.gmra.mxu0 %v526
        %v669 = vpop.f32.mrf.mxu0
        %v670 = vadd.f32 0.0, %v669
        %v671 = vpop.f32.mrf.mxu0
        %672 = vdwg.mxu0
        %vm673 = vcmask 392192
        %v675 = vsel %vm673, %v447, 0
        %v678 = vsel %vm673, %v448, 0
        %v681 = vsel %vm673, %v449, 0
        %v684 = vsel %vm673, %v450, 0
        %v687 = vsel %vm673, %v451, 0
        %v690 = vsel %vm673, %v452, 0
        %v693 = vsel %vm673, %v453, 0
        %v696 = vsel %vm673, %v454, 0
        %v699 = vsel %vm673, %v455, 0
        %v702 = vsel %vm673, %v456, 0
        %v705 = vsel %vm673, %v457, 0
        %v708 = vsel %vm673, %v458, 0
        %v711 = vsel %vm673, %v459, 0
        %v714 = vsel %vm673, %v460, 0
        %v717 = vsel %vm673, %v461, 0
        %v720 = vsel %vm673, %v462, 0
        %722 = vmatprep.subr.mxu0 0.0
        %723 = vmatpush1.msra.mxu0 0.0
        %724 = vmatprep.subr.mxu0 0.0
        %725 = vmatpush1.msra.mxu0 0.0
        %726 = vmatprep.subr.mxu0 0.0
        %727 = vmatpush1.msra.mxu0 0.0
        %728 = vmatprep.subr.mxu0 0.0
        %729 = vmatpush1.msra.mxu0 0.0
        %730 = vmatprep.subr.mxu0 0.0
        %731 = vmatpush1.msra.mxu0 0.0
        %732 = vmatprep.subr.mxu0 0.0
        %733 = vmatpush1.msra.mxu0 0.0
        %734 = vmatprep.subr.mxu0 0.0
        %735 = vmatpush1.msra.mxu0 0.0
        %736 = vmatprep.subr.mxu0 0.0
        %737 = vmatpush1.msra.mxu0 0.0
        %738 = vmatprep.subr.mxu0 0.0
        %739 = vmatpush1.msra.mxu0 0.0
        %740 = vmatprep.subr.mxu0 0.0
        %741 = vmatpush1.msra.mxu0 0.0
        %742 = vmatprep.subr.mxu0 0.0
        %743 = vmatpush1.msra.mxu0 %v437
        %744 = vmatprep.subr.mxu0 0.0
        %745 = vmatpush1.msra.mxu0 %v436
        %746 = vmatprep.subr.mxu0 0.0
        %747 = vmatpush1.msra.mxu0 %v435
        %748 = vmatprep.subr.mxu0 0.0
        %749 = vmatpush1.msra.mxu0 %v434
        %750 = vmatprep.subr.mxu0 0.0
        %751 = vmatpush1.msra.mxu0 %v433
        %752 = vmatprep.subr.mxu0 0.0
        %753 = vmatpush1.msra.mxu0 %v432
        %754 = vmatprep.subr.mxu0 0.0
        %755 = vmatpush2.msra.mxu0 0.0
        %756 = vmatprep.subr.mxu0 0.0
        %757 = vmatpush2.msra.mxu0 0.0
        %758 = vmatprep.subr.mxu0 0.0
        %759 = vmatpush2.msra.mxu0 0.0
        %760 = vmatprep.subr.mxu0 0.0
        %761 = vmatpush2.msra.mxu0 0.0
        %762 = vmatprep.subr.mxu0 0.0
        %763 = vmatpush2.msra.mxu0 0.0
        %764 = vmatprep.subr.mxu0 0.0
        %765 = vmatpush2.msra.mxu0 0.0
        %766 = vmatprep.subr.mxu0 0.0
        %767 = vmatpush2.msra.mxu0 0.0
        %768 = vmatprep.subr.mxu0 0.0
        %769 = vmatpush2.msra.mxu0 0.0
        %770 = vmatprep.subr.mxu0 0.0
        %771 = vmatpush2.msra.mxu0 0.0
        %772 = vmatprep.subr.mxu0 0.0
        %773 = vmatpush2.msra.mxu0 0.0
        %774 = vmatprep.subr.mxu0 0.0
        %775 = vmatpush2.msra.mxu0 0.0
        %776 = vmatprep.subr.mxu0 0.0
        %777 = vmatpush2.msra.mxu0 0.0
        %778 = vmatprep.subr.mxu0 0.0
        %779 = vmatpush2.msra.mxu0 0.0
        %780 = vmatprep.subr.mxu0 0.0
        %781 = vmatpush2.msra.mxu0 0.0
        %782 = vmatprep.subr.mxu0 0.0
        %783 = vmatpush2.msra.mxu0 0.0
        %784 = vmatprep.subr.mxu0 0.0
        %785 = vmatpush2.msra.mxu0 0.0
        %786 = vmatprep.mubr.f32.mxu0 0.0
        %787 = vmatmul.mubr.f32.gmra.mxu0 %v675
        %v788 = vpop.f32.mrf.mxu0
        %v789 = vadd.f32 %v595, %v788
        %v790 = vpop.f32.mrf.mxu0
        %791 = vmatprep.mubr.f32.mxu0 0.0
        %792 = vmatmul.mubr.f32.gmra.mxu0 %v678
        %v793 = vpop.f32.mrf.mxu0
        %v794 = vadd.f32 %v600, %v793
        %v795 = vpop.f32.mrf.mxu0
        %796 = vmatprep.mubr.f32.mxu0 0.0
        %797 = vmatmul.mubr.f32.gmra.mxu0 %v681
        %v798 = vpop.f32.mrf.mxu0
        %v799 = vadd.f32 %v605, %v798
        %v800 = vpop.f32.mrf.mxu0
        %801 = vmatprep.mubr.f32.mxu0 0.0
        %802 = vmatmul.mubr.f32.gmra.mxu0 %v684
        %v803 = vpop.f32.mrf.mxu0
        %v804 = vadd.f32 %v610, %v803
        %v805 = vpop.f32.mrf.mxu0
        %806 = vmatprep.mubr.f32.mxu0 0.0
        %807 = vmatmul.mubr.f32.gmra.mxu0 %v687
        %v808 = vpop.f32.mrf.mxu0
        %v809 = vadd.f32 %v615, %v808
        %v810 = vpop.f32.mrf.mxu0
        %811 = vmatprep.mubr.f32.mxu0 0.0
        %812 = vmatmul.mubr.f32.gmra.mxu0 %v690
        %v813 = vpop.f32.mrf.mxu0
        %v814 = vadd.f32 %v620, %v813
        %v815 = vpop.f32.mrf.mxu0
        %816 = vmatprep.mubr.f32.mxu0 0.0
        %817 = vmatmul.mubr.f32.gmra.mxu0 %v693
        %v818 = vpop.f32.mrf.mxu0
        %v819 = vadd.f32 %v625, %v818
        %v820 = vpop.f32.mrf.mxu0
        %821 = vmatprep.mubr.f32.mxu0 0.0
        %822 = vmatmul.mubr.f32.gmra.mxu0 %v696
        %v823 = vpop.f32.mrf.mxu0
        %v824 = vadd.f32 %v630, %v823
        %v825 = vpop.f32.mrf.mxu0
        %826 = vmatprep.mubr.f32.mxu0 0.0
        %827 = vmatmul.mubr.f32.gmra.mxu0 %v699
        %v828 = vpop.f32.mrf.mxu0
        %v829 = vadd.f32 %v635, %v828
        %v830 = vpop.f32.mrf.mxu0
        %831 = vmatprep.mubr.f32.mxu0 0.0
        %832 = vmatmul.mubr.f32.gmra.mxu0 %v702
        %v833 = vpop.f32.mrf.mxu0
        %v834 = vadd.f32 %v640, %v833
        %v835 = vpop.f32.mrf.mxu0
        %836 = vmatprep.mubr.f32.mxu0 0.0
        %837 = vmatmul.mubr.f32.gmra.mxu0 %v705
        %v838 = vpop.f32.mrf.mxu0
        %v839 = vadd.f32 %v645, %v838
        %v840 = vpop.f32.mrf.mxu0
        %841 = vmatprep.mubr.f32.mxu0 0.0
        %842 = vmatmul.mubr.f32.gmra.mxu0 %v708
        %v843 = vpop.f32.mrf.mxu0
        %v844 = vadd.f32 %v650, %v843
        %v845 = vpop.f32.mrf.mxu0
        %846 = vmatprep.mubr.f32.mxu0 0.0
        %847 = vmatmul.mubr.f32.gmra.mxu0 %v711
        %v848 = vpop.f32.mrf.mxu0
        %v849 = vadd.f32 %v655, %v848
        %v850 = vpop.f32.mrf.mxu0
        %851 = vmatprep.mubr.f32.mxu0 0.0
        %852 = vmatmul.mubr.f32.gmra.mxu0 %v714
        %v853 = vpop.f32.mrf.mxu0
        %v854 = vadd.f32 %v660, %v853
        %v855 = vpop.f32.mrf.mxu0
        %856 = vmatprep.mubr.f32.mxu0 0.0
        %857 = vmatmul.mubr.f32.gmra.mxu0 %v717
        %v858 = vpop.f32.mrf.mxu0
        %v859 = vadd.f32 %v665, %v858
        %v860 = vpop.f32.mrf.mxu0
        %861 = vmatprep.mubr.f32.mxu0 0.0
        %862 = vmatmul.mubr.f32.gmra.mxu0 %v720
        %v863 = vpop.f32.mrf.mxu0
        %v864 = vadd.f32 %v670, %v863
        %v865 = vpop.f32.mrf.mxu0
        %866 = vdwg.mxu0
        %v867 = vld [vmem:[%s430] sm:$0xff]
        %v868 = vld [vmem:[%s430 + $0x8] sm:$0xff]
        %v869 = vld [vmem:[%s430 + $0x10] sm:$0xff]
        %v870 = vld [vmem:[%s430 + $0x18] sm:$0xff]
        %v871 = vld [vmem:[%s430 + $0x20] sm:$0xff]
        %v872 = vld [vmem:[%s430 + $0x28] sm:$0xff]
        %v873 = vld [vmem:[%s430 + $0x30] sm:$0xff]
        %v874 = vld [vmem:[%s430 + $0x38] sm:$0xff]
        %v875 = vld [vmem:[%s430 + $0x40] sm:$0xff]
        %v876 = vld [vmem:[%s430 + $0x48] sm:$0xff]
        %v877 = vld [vmem:[%s430 + $0x50] sm:$0xff]
        %v878 = vld [vmem:[%s430 + $0x58] sm:$0xff]
        %v879 = vld [vmem:[%s430 + $0x60] sm:$0xff]
        %v880 = vld [vmem:[%s430 + $0x68] sm:$0xff]
        %v881 = vld [vmem:[%s430 + $0x70] sm:$0xff]
        %v882 = vld [vmem:[%s430 + $0x78] sm:$0xff]
        %v884 = vsel %vm479, %v867, 0
        %v887 = vsel %vm479, %v868, 0
        %v890 = vsel %vm479, %v869, 0
        %v893 = vsel %vm479, %v870, 0
        %v896 = vsel %vm479, %v871, 0
        %v899 = vsel %vm479, %v872, 0
        %v902 = vsel %vm479, %v873, 0
        %v905 = vsel %vm479, %v874, 0
        %v908 = vsel %vm479, %v875, 0
        %v911 = vsel %vm479, %v876, 0
        %v914 = vsel %vm479, %v877, 0
        %v917 = vsel %vm479, %v878, 0
        %v920 = vsel %vm479, %v879, 0
        %v923 = vsel %vm479, %v880, 0
        %v926 = vsel %vm479, %v881, 0
        %v929 = vsel %vm479, %v882, 0
        %931 = vmatprep.subr.mxu0 0.0
        %932 = vmatpush1.msra.mxu0 0.0
        %933 = vmatprep.subr.mxu0 0.0
        %934 = vmatpush1.msra.mxu0 0.0
        %935 = vmatprep.subr.mxu0 0.0
        %936 = vmatpush1.msra.mxu0 0.0
        %937 = vmatprep.subr.mxu0 0.0
        %938 = vmatpush1.msra.mxu0 0.0
        %939 = vmatprep.subr.mxu0 0.0
        %940 = vmatpush1.msra.mxu0 0.0
        %941 = vmatprep.subr.mxu0 0.0
        %942 = vmatpush1.msra.mxu0 0.0
        %943 = vmatprep.subr.mxu0 0.0
        %944 = vmatpush1.msra.mxu0 0.0
        %945 = vmatprep.subr.mxu0 0.0
        %946 = vmatpush1.msra.mxu0 0.0
        %947 = vmatprep.subr.mxu0 0.0
        %948 = vmatpush1.msra.mxu0 0.0
        %949 = vmatprep.subr.mxu0 0.0
        %950 = vmatpush1.msra.mxu0 0.0
        %951 = vmatprep.subr.mxu0 0.0
        %952 = vmatpush1.msra.mxu0 0.0
        %953 = vmatprep.subr.mxu0 0.0
        %954 = vmatpush1.msra.mxu0 0.0
        %955 = vmatprep.subr.mxu0 0.0
        %956 = vmatpush1.msra.mxu0 %v445
        %957 = vmatprep.subr.mxu0 0.0
        %958 = vmatpush1.msra.mxu0 %v444
        %959 = vmatprep.subr.mxu0 0.0
        %960 = vmatpush1.msra.mxu0 %v443
        %961 = vmatprep.subr.mxu0 0.0
        %962 = vmatpush1.msra.mxu0 %v442
        %963 = vmatprep.subr.mxu0 0.0
        %964 = vmatpush2.msra.mxu0 0.0
        %965 = vmatprep.subr.mxu0 0.0
        %966 = vmatpush2.msra.mxu0 0.0
        %967 = vmatprep.subr.mxu0 0.0
        %968 = vmatpush2.msra.mxu0 0.0
        %969 = vmatprep.subr.mxu0 0.0
        %970 = vmatpush2.msra.mxu0 0.0
        %971 = vmatprep.subr.mxu0 0.0
        %972 = vmatpush2.msra.mxu0 0.0
        %973 = vmatprep.subr.mxu0 0.0
        %974 = vmatpush2.msra.mxu0 0.0
        %975 = vmatprep.subr.mxu0 0.0
        %976 = vmatpush2.msra.mxu0 0.0
        %977 = vmatprep.subr.mxu0 0.0
        %978 = vmatpush2.msra.mxu0 0.0
        %979 = vmatprep.subr.mxu0 0.0
        %980 = vmatpush2.msra.mxu0 0.0
        %981 = vmatprep.subr.mxu0 0.0
        %982 = vmatpush2.msra.mxu0 0.0
        %983 = vmatprep.subr.mxu0 0.0
        %984 = vmatpush2.msra.mxu0 0.0
        %985 = vmatprep.subr.mxu0 0.0
        %986 = vmatpush2.msra.mxu0 0.0
        %987 = vmatprep.subr.mxu0 0.0
        %988 = vmatpush2.msra.mxu0 0.0
        %989 = vmatprep.subr.mxu0 0.0
        %990 = vmatpush2.msra.mxu0 0.0
        %991 = vmatprep.subr.mxu0 0.0
        %992 = vmatpush2.msra.mxu0 0.0
        %993 = vmatprep.subr.mxu0 0.0
        %994 = vmatpush2.msra.mxu0 0.0
        %995 = vmatprep.mubr.f32.mxu0 0.0
        %996 = vmatmul.mubr.f32.gmra.mxu0 %v884
        %v997 = vpop.f32.mrf.mxu0
        %v998 = vadd.f32 0.0, %v997
        %v999 = vpop.f32.mrf.mxu0
        %1000 = vmatprep.mubr.f32.mxu0 0.0
        %1001 = vmatmul.mubr.f32.gmra.mxu0 %v887
        %v1002 = vpop.f32.mrf.mxu0
        %v1003 = vadd.f32 0.0, %v1002
        %v1004 = vpop.f32.mrf.mxu0
        %1005 = vmatprep.mubr.f32.mxu0 0.0
        %1006 = vmatmul.mubr.f32.gmra.mxu0 %v890
        %v1007 = vpop.f32.mrf.mxu0
        %v1008 = vadd.f32 0.0, %v1007
        %v1009 = vpop.f32.mrf.mxu0
        %1010 = vmatprep.mubr.f32.mxu0 0.0
        %1011 = vmatmul.mubr.f32.gmra.mxu0 %v893
        %v1012 = vpop.f32.mrf.mxu0
        %v1013 = vadd.f32 0.0, %v1012
        %v1014 = vpop.f32.mrf.mxu0
        %1015 = vmatprep.mubr.f32.mxu0 0.0
        %1016 = vmatmul.mubr.f32.gmra.mxu0 %v896
        %v1017 = vpop.f32.mrf.mxu0
        %v1018 = vadd.f32 0.0, %v1017
        %v1019 = vpop.f32.mrf.mxu0
        %1020 = vmatprep.mubr.f32.mxu0 0.0
        %1021 = vmatmul.mubr.f32.gmra.mxu0 %v899
        %v1022 = vpop.f32.mrf.mxu0
        %v1023 = vadd.f32 0.0, %v1022
        %v1024 = vpop.f32.mrf.mxu0
        %1025 = vmatprep.mubr.f32.mxu0 0.0
        %1026 = vmatmul.mubr.f32.gmra.mxu0 %v902
        %v1027 = vpop.f32.mrf.mxu0
        %v1028 = vadd.f32 0.0, %v1027
        %v1029 = vpop.f32.mrf.mxu0
        %1030 = vmatprep.mubr.f32.mxu0 0.0
        %1031 = vmatmul.mubr.f32.gmra.mxu0 %v905
        %v1032 = vpop.f32.mrf.mxu0
        %v1033 = vadd.f32 0.0, %v1032
        %v1034 = vpop.f32.mrf.mxu0
        %1035 = vmatprep.mubr.f32.mxu0 0.0
        %1036 = vmatmul.mubr.f32.gmra.mxu0 %v908
        %v1037 = vpop.f32.mrf.mxu0
        %v1038 = vadd.f32 0.0, %v1037
        %v1039 = vpop.f32.mrf.mxu0
        %1040 = vmatprep.mubr.f32.mxu0 0.0
        %1041 = vmatmul.mubr.f32.gmra.mxu0 %v911
        %v1042 = vpop.f32.mrf.mxu0
        %v1043 = vadd.f32 0.0, %v1042
        %v1044 = vpop.f32.mrf.mxu0
        %1045 = vmatprep.mubr.f32.mxu0 0.0
        %1046 = vmatmul.mubr.f32.gmra.mxu0 %v914
        %v1047 = vpop.f32.mrf.mxu0
        %v1048 = vadd.f32 0.0, %v1047
        %v1049 = vpop.f32.mrf.mxu0
        %1050 = vmatprep.mubr.f32.mxu0 0.0
        %1051 = vmatmul.mubr.f32.gmra.mxu0 %v917
        %v1052 = vpop.f32.mrf.mxu0
        %v1053 = vadd.f32 0.0, %v1052
        %v1054 = vpop.f32.mrf.mxu0
        %1055 = vmatprep.mubr.f32.mxu0 0.0
        %1056 = vmatmul.mubr.f32.gmra.mxu0 %v920
        %v1057 = vpop.f32.mrf.mxu0
        %v1058 = vadd.f32 0.0, %v1057
        %v1059 = vpop.f32.mrf.mxu0
        %1060 = vmatprep.mubr.f32.mxu0 0.0
        %1061 = vmatmul.mubr.f32.gmra.mxu0 %v923
        %v1062 = vpop.f32.mrf.mxu0
        %v1063 = vadd.f32 0.0, %v1062
        %v1064 = vpop.f32.mrf.mxu0
        %1065 = vmatprep.mubr.f32.mxu0 0.0
        %1066 = vmatmul.mubr.f32.gmra.mxu0 %v926
        %v1067 = vpop.f32.mrf.mxu0
        %v1068 = vadd.f32 0.0, %v1067
        %v1069 = vpop.f32.mrf.mxu0
        %1070 = vmatprep.mubr.f32.mxu0 0.0
        %1071 = vmatmul.mubr.f32.gmra.mxu0 %v929
        %v1072 = vpop.f32.mrf.mxu0
        %v1073 = vadd.f32 0.0, %v1072
        %v1074 = vpop.f32.mrf.mxu0
        %1075 = vdwg.mxu0
        %v1076 = vadd.f32 %v789, %v998
        %v1077 = vadd.f32 %v794, %v1003
        %v1078 = vadd.f32 %v799, %v1008
        %v1079 = vadd.f32 %v804, %v1013
        %v1080 = vadd.f32 %v809, %v1018
        %v1081 = vadd.f32 %v814, %v1023
        %v1082 = vadd.f32 %v819, %v1028
        %v1083 = vadd.f32 %v824, %v1033
        %v1084 = vadd.f32 %v829, %v1038
        %v1085 = vadd.f32 %v834, %v1043
        %v1086 = vadd.f32 %v839, %v1048
        %v1087 = vadd.f32 %v844, %v1053
        %v1088 = vadd.f32 %v849, %v1058
        %v1089 = vadd.f32 %v854, %v1063
        %v1090 = vadd.f32 %v859, %v1068
        %v1091 = vadd.f32 %v864, %v1073
        %v1093 = vlaneseq
        %v1094 = vshrl.u32 %v1093, 7
        %v1095 = vsub.s32 0, %v1094
        %v1096 = vrot.slane %v446, %v1095
        %v1098 = vadd.f32 %v1076, %v1096
        %v1099 = vadd.f32 %v1077, %v1096
        %v1100 = vadd.f32 %v1078, %v1096
        %v1101 = vadd.f32 %v1079, %v1096
        %v1102 = vadd.f32 %v1080, %v1096
        %v1103 = vadd.f32 %v1081, %v1096
        %v1104 = vadd.f32 %v1082, %v1096
        %v1105 = vadd.f32 %v1083, %v1096
        %v1106 = vadd.f32 %v1084, %v1096
        %v1107 = vadd.f32 %v1085, %v1096
        %v1108 = vadd.f32 %v1086, %v1096
        %v1109 = vadd.f32 %v1087, %v1096
        %v1110 = vadd.f32 %v1088, %v1096
        %v1111 = vadd.f32 %v1089, %v1096
        %v1112 = vadd.f32 %v1090, %v1096
        %v1113 = vadd.f32 %v1091, %v1096
        %v1114 = vmax.f32 %v1098, 0.0
        %v1115 = vmax.f32 %v1099, 0.0
        %v1116 = vmax.f32 %v1100, 0.0
        %v1117 = vmax.f32 %v1101, 0.0
        %v1118 = vmax.f32 %v1102, 0.0
        %v1119 = vmax.f32 %v1103, 0.0
        %v1120 = vmax.f32 %v1104, 0.0
        %v1121 = vmax.f32 %v1105, 0.0
        %v1122 = vmax.f32 %v1106, 0.0
        %v1123 = vmax.f32 %v1107, 0.0
        %v1124 = vmax.f32 %v1108, 0.0
        %v1125 = vmax.f32 %v1109, 0.0
        %v1126 = vmax.f32 %v1110, 0.0
        %v1127 = vmax.f32 %v1111, 0.0
        %v1128 = vmax.f32 %v1112, 0.0
        %v1129 = vmax.f32 %v1113, 0.0
        %v1130 = vld [vmem:[%s7] sm:$0xff]
        %v1131 = vld [vmem:[%s7 + $0x8] sm:$0xff]
        %v1132 = vld [vmem:[%s7 + $0x10] sm:$0xff]
        %v1133 = vld [vmem:[%s7 + $0x18] sm:$0xff]
        %v1134 = vld [vmem:[%s7 + $0x20] sm:$0xff]
        %v1135 = vld [vmem:[%s7 + $0x28] sm:$0xff]
        %v1136 = vld [vmem:[%s7 + $0x30] sm:$0xff]
        %v1137 = vld [vmem:[%s8] sm:$0x1]
        %v1139 = vlaneseq
        %v1140 = vshrl.u32 %v1139, 7
        %v1141 = vsub.s32 0, %v1140
        %v1142 = vrot.slane %v1137, %v1141
        %vm1144 = vcmask 457728
        %v1146 = vsel %vm1144, %v1114, 0
        %v1149 = vsel %vm1144, %v1115, 0
        %v1152 = vsel %vm1144, %v1116, 0
        %v1155 = vsel %vm1144, %v1117, 0
        %v1158 = vsel %vm1144, %v1118, 0
        %v1161 = vsel %vm1144, %v1119, 0
        %v1164 = vsel %vm1144, %v1120, 0
        %v1167 = vsel %vm1144, %v1121, 0
        %v1170 = vsel %vm1144, %v1122, 0
        %v1173 = vsel %vm1144, %v1123, 0
        %v1176 = vsel %vm1144, %v1124, 0
        %v1179 = vsel %vm1144, %v1125, 0
        %v1182 = vsel %vm1144, %v1126, 0
        %v1185 = vsel %vm1144, %v1127, 0
        %v1188 = vsel %vm1144, %v1128, 0
        %v1191 = vsel %vm1144, %v1129, 0
        %1193 = vmatprep.subr.mxu0 0.0
        %1194 = vmatpush1.msra.mxu0 0.0
        %1195 = vmatprep.subr.mxu0 0.0
        %1196 = vmatpush1.msra.mxu0 0.0
        %1197 = vmatprep.subr.mxu0 0.0
        %1198 = vmatpush1.msra.mxu0 0.0
        %1199 = vmatprep.subr.mxu0 0.0
        %1200 = vmatpush1.msra.mxu0 0.0
        %1201 = vmatprep.subr.mxu0 0.0
        %1202 = vmatpush1.msra.mxu0 0.0
        %1203 = vmatprep.subr.mxu0 0.0
        %1204 = vmatpush1.msra.mxu0 0.0
        %1205 = vmatprep.subr.mxu0 0.0
        %1206 = vmatpush1.msra.mxu0 0.0
        %1207 = vmatprep.subr.mxu0 0.0
        %1208 = vmatpush1.msra.mxu0 0.0
        %1209 = vmatprep.subr.mxu0 0.0
        %1210 = vmatpush1.msra.mxu0 0.0
        %1211 = vmatprep.subr.mxu0 0.0
        %1212 = vmatpush1.msra.mxu0 %v1136
        %1213 = vmatprep.subr.mxu0 0.0
        %1214 = vmatpush1.msra.mxu0 %v1135
        %1215 = vmatprep.subr.mxu0 0.0
        %1216 = vmatpush1.msra.mxu0 %v1134
        %1217 = vmatprep.subr.mxu0 0.0
        %1218 = vmatpush1.msra.mxu0 %v1133
        %1219 = vmatprep.subr.mxu0 0.0
        %1220 = vmatpush1.msra.mxu0 %v1132
        %1221 = vmatprep.subr.mxu0 0.0
        %1222 = vmatpush1.msra.mxu0 %v1131
        %1223 = vmatprep.subr.mxu0 0.0
        %1224 = vmatpush1.msra.mxu0 %v1130
        %1225 = vmatprep.subr.mxu0 0.0
        %1226 = vmatpush2.msra.mxu0 0.0
        %1227 = vmatprep.subr.mxu0 0.0
        %1228 = vmatpush2.msra.mxu0 0.0
        %1229 = vmatprep.subr.mxu0 0.0
        %1230 = vmatpush2.msra.mxu0 0.0
        %1231 = vmatprep.subr.mxu0 0.0
        %1232 = vmatpush2.msra.mxu0 0.0
        %1233 = vmatprep.subr.mxu0 0.0
        %1234 = vmatpush2.msra.mxu0 0.0
        %1235 = vmatprep.subr.mxu0 0.0
        %1236 = vmatpush2.msra.mxu0 0.0
        %1237 = vmatprep.subr.mxu0 0.0
        %1238 = vmatpush2.msra.mxu0 0.0
        %1239 = vmatprep.subr.mxu0 0.0
        %1240 = vmatpush2.msra.mxu0 0.0
        %1241 = vmatprep.subr.mxu0 0.0
        %1242 = vmatpush2.msra.mxu0 0.0
        %1243 = vmatprep.subr.mxu0 0.0
        %1244 = vmatpush2.msra.mxu0 0.0
        %1245 = vmatprep.subr.mxu0 0.0
        %1246 = vmatpush2.msra.mxu0 0.0
        %1247 = vmatprep.subr.mxu0 0.0
        %1248 = vmatpush2.msra.mxu0 0.0
        %1249 = vmatprep.subr.mxu0 0.0
        %1250 = vmatpush2.msra.mxu0 0.0
        %1251 = vmatprep.subr.mxu0 0.0
        %1252 = vmatpush2.msra.mxu0 0.0
        %1253 = vmatprep.subr.mxu0 0.0
        %1254 = vmatpush2.msra.mxu0 0.0
        %1255 = vmatprep.subr.mxu0 0.0
        %1256 = vmatpush2.msra.mxu0 0.0
        %1257 = vmatprep.mubr.f32.mxu0 0.0
        %1258 = vmatmul.mubr.f32.gmra.mxu0 %v1146
        %v1259 = vpop.f32.mrf.mxu0
        %v1260 = vadd.f32 %v1142, %v1259
        %v1261 = vpop.f32.mrf.mxu0
        %1262 = vmatprep.mubr.f32.mxu0 0.0
        %1263 = vmatmul.mubr.f32.gmra.mxu0 %v1149
        %v1264 = vpop.f32.mrf.mxu0
        %v1265 = vadd.f32 %v1142, %v1264
        %v1266 = vpop.f32.mrf.mxu0
        %1267 = vmatprep.mubr.f32.mxu0 0.0
        %1268 = vmatmul.mubr.f32.gmra.mxu0 %v1152
        %v1269 = vpop.f32.mrf.mxu0
        %v1270 = vadd.f32 %v1142, %v1269
        %v1271 = vpop.f32.mrf.mxu0
        %1272 = vmatprep.mubr.f32.mxu0 0.0
        %1273 = vmatmul.mubr.f32.gmra.mxu0 %v1155
        %v1274 = vpop.f32.mrf.mxu0
        %v1275 = vadd.f32 %v1142, %v1274
        %v1276 = vpop.f32.mrf.mxu0
        %1277 = vmatprep.mubr.f32.mxu0 0.0
        %1278 = vmatmul.mubr.f32.gmra.mxu0 %v1158
        %v1279 = vpop.f32.mrf.mxu0
        %v1280 = vadd.f32 %v1142, %v1279
        %v1281 = vpop.f32.mrf.mxu0
        %1282 = vmatprep.mubr.f32.mxu0 0.0
        %1283 = vmatmul.mubr.f32.gmra.mxu0 %v1161
        %v1284 = vpop.f32.mrf.mxu0
        %v1285 = vadd.f32 %v1142, %v1284
        %v1286 = vpop.f32.mrf.mxu0
        %1287 = vmatprep.mubr.f32.mxu0 0.0
        %1288 = vmatmul.mubr.f32.gmra.mxu0 %v1164
        %v1289 = vpop.f32.mrf.mxu0
        %v1290 = vadd.f32 %v1142, %v1289
        %v1291 = vpop.f32.mrf.mxu0
        %1292 = vmatprep.mubr.f32.mxu0 0.0
        %1293 = vmatmul.mubr.f32.gmra.mxu0 %v1167
        %v1294 = vpop.f32.mrf.mxu0
        %v1295 = vadd.f32 %v1142, %v1294
        %v1296 = vpop.f32.mrf.mxu0
        %1297 = vmatprep.mubr.f32.mxu0 0.0
        %1298 = vmatmul.mubr.f32.gmra.mxu0 %v1170
        %v1299 = vpop.f32.mrf.mxu0
        %v1300 = vadd.f32 %v1142, %v1299
        %v1301 = vpop.f32.mrf.mxu0
        %1302 = vmatprep.mubr.f32.mxu0 0.0
        %1303 = vmatmul.mubr.f32.gmra.mxu0 %v1173
        %v1304 = vpop.f32.mrf.mxu0
        %v1305 = vadd.f32 %v1142, %v1304
        %v1306 = vpop.f32.mrf.mxu0
        %1307 = vmatprep.mubr.f32.mxu0 0.0
        %1308 = vmatmul.mubr.f32.gmra.mxu0 %v1176
        %v1309 = vpop.f32.mrf.mxu0
        %v1310 = vadd.f32 %v1142, %v1309
        %v1311 = vpop.f32.mrf.mxu0
        %1312 = vmatprep.mubr.f32.mxu0 0.0
        %1313 = vmatmul.mubr.f32.gmra.mxu0 %v1179
        %v1314 = vpop.f32.mrf.mxu0
        %v1315 = vadd.f32 %v1142, %v1314
        %v1316 = vpop.f32.mrf.mxu0
        %1317 = vmatprep.mubr.f32.mxu0 0.0
        %1318 = vmatmul.mubr.f32.gmra.mxu0 %v1182
        %v1319 = vpop.f32.mrf.mxu0
        %v1320 = vadd.f32 %v1142, %v1319
        %v1321 = vpop.f32.mrf.mxu0
        %1322 = vmatprep.mubr.f32.mxu0 0.0
        %1323 = vmatmul.mubr.f32.gmra.mxu0 %v1185
        %v1324 = vpop.f32.mrf.mxu0
        %v1325 = vadd.f32 %v1142, %v1324
        %v1326 = vpop.f32.mrf.mxu0
        %1327 = vmatprep.mubr.f32.mxu0 0.0
        %1328 = vmatmul.mubr.f32.gmra.mxu0 %v1188
        %v1329 = vpop.f32.mrf.mxu0
        %v1330 = vadd.f32 %v1142, %v1329
        %v1331 = vpop.f32.mrf.mxu0
        %1332 = vmatprep.mubr.f32.mxu0 0.0
        %1333 = vmatmul.mubr.f32.gmra.mxu0 %v1191
        %v1334 = vpop.f32.mrf.mxu0
        %v1335 = vadd.f32 %v1142, %v1334
        %v1336 = vpop.f32.mrf.mxu0
        %1337 = vdwg.mxu0
        %v1338 = vmax.f32 %v1260, 0.0
        %v1339 = vmax.f32 %v1265, 0.0
        %v1340 = vmax.f32 %v1270, 0.0
        %v1341 = vmax.f32 %v1275, 0.0
        %v1342 = vmax.f32 %v1280, 0.0
        %v1343 = vmax.f32 %v1285, 0.0
        %v1344 = vmax.f32 %v1290, 0.0
        %v1345 = vmax.f32 %v1295, 0.0
        %v1346 = vmax.f32 %v1300, 0.0
        %v1347 = vmax.f32 %v1305, 0.0
        %v1348 = vmax.f32 %v1310, 0.0
        %v1349 = vmax.f32 %v1315, 0.0
        %v1350 = vmax.f32 %v1320, 0.0
        %v1351 = vmax.f32 %v1325, 0.0
        %v1352 = vmax.f32 %v1330, 0.0
        %v1353 = vmax.f32 %v1335, 0.0
        %v1354 = vld [vmem:[%s9] sm:$0x1]
        %v1355 = vld [vmem:[#allocation2] sm:$0x1]
        %1357 = vset.pattern.permute.xlu0 0
        %1358 = vperm.xlu0 %1357, %v1355
        %v1359 = vpop.permute.xlu0 %1358
        %v1361 = vlaneseq
        %v1362 = vshrl.u32 %v1361, 7
        %v1363 = vsub.s32 0, %v1362
        %v1364 = vrot.slane %v1359, %v1363
        %vm1365 = vcmask 228352
        %v1367 = vsel %vm1365, %v1354, 0
        %v1370 = vsel %vm1365, %v1338, 0
        %v1373 = vsel %vm1365, %v1339, 0
        %v1376 = vsel %vm1365, %v1340, 0
        %v1379 = vsel %vm1365, %v1341, 0
        %v1382 = vsel %vm1365, %v1342, 0
        %v1385 = vsel %vm1365, %v1343, 0
        %v1388 = vsel %vm1365, %v1344, 0
        %v1391 = vsel %vm1365, %v1345, 0
        %v1394 = vsel %vm1365, %v1346, 0
        %v1397 = vsel %vm1365, %v1347, 0
        %v1400 = vsel %vm1365, %v1348, 0
        %v1403 = vsel %vm1365, %v1349, 0
        %v1406 = vsel %vm1365, %v1350, 0
        %v1409 = vsel %vm1365, %v1351, 0
        %v1412 = vsel %vm1365, %v1352, 0
        %v1415 = vsel %vm1365, %v1353, 0
        %1417 = vmatprep.subr.mxu0 0.0
        %1418 = vmatpush1.xpose.msra.mxu0 %v1415
        %1419 = vmatprep.subr.mxu0 0.0
        %1420 = vmatpush1.xpose.msra.mxu0 %v1412
        %1421 = vmatprep.subr.mxu0 0.0
        %1422 = vmatpush1.xpose.msra.mxu0 %v1409
        %1423 = vmatprep.subr.mxu0 0.0
        %1424 = vmatpush1.xpose.msra.mxu0 %v1406
        %1425 = vmatprep.subr.mxu0 0.0
        %1426 = vmatpush1.xpose.msra.mxu0 %v1403
        %1427 = vmatprep.subr.mxu0 0.0
        %1428 = vmatpush1.xpose.msra.mxu0 %v1400
        %1429 = vmatprep.subr.mxu0 0.0
        %1430 = vmatpush1.xpose.msra.mxu0 %v1397
        %1431 = vmatprep.subr.mxu0 0.0
        %1432 = vmatpush1.xpose.msra.mxu0 %v1394
        %1433 = vmatprep.subr.mxu0 0.0
        %1434 = vmatpush1.xpose.msra.mxu0 %v1391
        %1435 = vmatprep.subr.mxu0 0.0
        %1436 = vmatpush1.xpose.msra.mxu0 %v1388
        %1437 = vmatprep.subr.mxu0 0.0
        %1438 = vmatpush1.xpose.msra.mxu0 %v1385
        %1439 = vmatprep.subr.mxu0 0.0
        %1440 = vmatpush1.xpose.msra.mxu0 %v1382
        %1441 = vmatprep.subr.mxu0 0.0
        %1442 = vmatpush1.xpose.msra.mxu0 %v1379
        %1443 = vmatprep.subr.mxu0 0.0
        %1444 = vmatpush1.xpose.msra.mxu0 %v1376
        %1445 = vmatprep.subr.mxu0 0.0
        %1446 = vmatpush1.xpose.msra.mxu0 %v1373
        %1447 = vmatprep.subr.mxu0 0.0
        %1448 = vmatpush1.xpose.msra.mxu0 %v1370
        %1449 = vmatprep.subr.mxu0 0.0
        %1450 = vmatpush2.xpose.msra.mxu0 0.0
        %1451 = vmatprep.subr.mxu0 0.0
        %1452 = vmatpush2.xpose.msra.mxu0 0.0
        %1453 = vmatprep.subr.mxu0 0.0
        %1454 = vmatpush2.xpose.msra.mxu0 0.0
        %1455 = vmatprep.subr.mxu0 0.0
        %1456 = vmatpush2.xpose.msra.mxu0 0.0
        %1457 = vmatprep.subr.mxu0 0.0
        %1458 = vmatpush2.xpose.msra.mxu0 0.0
        %1459 = vmatprep.subr.mxu0 0.0
        %1460 = vmatpush2.xpose.msra.mxu0 0.0
        %1461 = vmatprep.subr.mxu0 0.0
        %1462 = vmatpush2.xpose.msra.mxu0 0.0
        %1463 = vmatprep.subr.mxu0 0.0
        %1464 = vmatpush2.xpose.msra.mxu0 0.0
        %1465 = vmatprep.subr.mxu0 0.0
        %1466 = vmatpush2.xpose.msra.mxu0 0.0
        %1467 = vmatprep.subr.mxu0 0.0
        %1468 = vmatpush2.xpose.msra.mxu0 0.0
        %1469 = vmatprep.subr.mxu0 0.0
        %1470 = vmatpush2.xpose.msra.mxu0 0.0
        %1471 = vmatprep.subr.mxu0 0.0
        %1472 = vmatpush2.xpose.msra.mxu0 0.0
        %1473 = vmatprep.subr.mxu0 0.0
        %1474 = vmatpush2.xpose.msra.mxu0 0.0
        %1475 = vmatprep.subr.mxu0 0.0
        %1476 = vmatpush2.xpose.msra.mxu0 0.0
        %1477 = vmatprep.subr.mxu0 0.0
        %1478 = vmatpush2.xpose.msra.mxu0 0.0
        %1479 = vmatprep.subr.mxu0 0.0
        %1480 = vmatpush2.xpose.msra.mxu0 0.0
        %1481 = vmatprep.mubr.f32.mxu0 0.0
        %1482 = vmatmul.mubr.f32.gmra.mxu0 %v1367
        %v1483 = vpop.f32.mrf.mxu0
        %v1484 = vadd.f32 %v1364, %v1483
        %v1485 = vpop.f32.mrf.mxu0
        %1486 = vdwg.mxu0
        %v1487 = vmul.f32 %v1484, %v1484
        %v1488 = vsub.f32 0.0, %v1487
        %v1489 = vmul.f32 %v1488, 1.442695
        %v1490 = vpow.pop %v1489
        %1491 = vst [vmem:[%s413] sm:$0x1] %v1490
        %s1492 = sand.u32 %s281, 1
        %s1493 = scalar_lea.sflag [#allocation4], %s1492
        %s1494 = sand.u32 %s281, 1
        %s1495 = scalar_lea.vmem [#allocation3], %s1494
        // Predicated region
        $region65: #{tpu_custom_call.1} parent=63 // pred_check
          %p1496 = pneg %p291
        $region66: #{tpu_custom_call.1} parent=63 // pred_check_branch
          %1498 = sbr.rel (%p1496) target = $region68
        $region67: #{tpu_custom_call.1} parent=63 // pred_region
          %s1500 = ssub.s32 16, 16
          %1501 = vsyncadd %s1493, %s1500
          %s1502 = smul.addr %s27, 16
          %s1503 = scalar_lea.hbm %s11, %s1502
          %s1505 = sshll.u32 %s1495, 4
          %s1506 = int_to_ptr.vmem [resolvable:$true] %s1505
          %1508 = dma.vmem_to_hbm [thread:$0]  %s1506, 16, %s1503, %s1493
        $region68: #{tpu_custom_call.1} parent=63 // pred_fallthru
          _
      $region64: #{tpu_custom_call.1} parent=5 // pred_fallthru
        _
      %p1509 = scmp.le.s32.totalorder 2, %s22
      // Predicated region
      $region69: #{tpu_custom_call.1} parent=5 // pred_check
        %p1510 = pneg %p1509
      $region70: #{tpu_custom_call.1} parent=5 // pred_check_branch
        %1512 = sbr.rel (%p1510) target = $region72
      $region71: #{tpu_custom_call.1} parent=5 // pred_region
        %s1513 = ssub.s32 %s22, 2
        // Predicated region
        $region73: #{tpu_custom_call.1} parent=71 // pred_check
          %p1514 = pneg %p297
        $region74: #{tpu_custom_call.1} parent=71 // pred_check_branch
          %1516 = sbr.rel (%p1514) target = $region76
        $region75: #{tpu_custom_call.1} parent=71 // pred_region
          %s1517 = sand.u32 %s282, 1
          %s1518 = scalar_lea.sflag [#allocation4], %s1517
          %s1519 = sand.u32 %s282, 1
          %s1520 = scalar_lea.vmem [#allocation3], %s1519
          %1521 = dma.done %s1518, 16
        $region76: #{tpu_custom_call.1} parent=71 // pred_fallthru
          _
      $region72: #{tpu_custom_call.1} parent=5 // pred_fallthru
        _
    $region6: #{tpu_custom_call.1} parent=1 // loop_footer
      %s26 = sadd.s32 1, %s22
    $region7: #{tpu_custom_call.1} parent=1 // loop_footer_branch
      %21 = sbr.rel target = $region3
    $region8: #{tpu_custom_call.1} parent=1 // loop_exit
      _
    %1522 = vsyncpa [#allocation4], 1
    %s1523 = scalar_lea.sflag [#allocation4], 1
    %1524 = vsyncpa %s1523, 1

</llo_original>
